<compile_context>
chip_gen: v7x
topology: tpu7x:2x2x1
jax: 0.10.0
libtpu: 0.0.40
codegen_flags: <defaults>
</compile_context>

<pallas_src>
import jax
import jax.numpy as jnp
from jax.experimental import pallas as pl
from jax.experimental.pallas import tpu as pltpu

MAX_INS = 10
IN_CHANNELS = 512
BN_EPS = 1e-5


def _sigmoid(x):
    # exp -> EUP; approx reciprocal -> EUP (frees VALU divide).
    return pl.reciprocal(1.0 + jnp.exp(-x), approx=True)


def _full_spec(shape):
    n = len(shape)
    return pl.BlockSpec(shape, lambda i, _n=n: (0,) * _n)


# ---------------------------------------------------------------------------
# Kernel 1: global-feature MLP head (fc1..fc6) + bbox min/max + sigmoid score.
# Single packed lane-dense output (B, 128):
#   lanes  0..29 : min vertices   (max_ins*3)
#   lanes 30..59 : max vertices   (max_ins*3)
#   lanes 60..69 : bbox scores    (max_ins)
#   lanes 70..127: zero padding
# fc4 is pre-split/duplicated into 128-wide column layouts (w4u/w4v) and fc6
# into w6s so the min/max over the two bbox vertices and the packing become
# pure elementwise ops (no lane shuffles).
# ---------------------------------------------------------------------------
def _bbox_head_kernel(g_ref, w1_ref, b1_ref, w2_ref, b2_ref, w3_ref, b3_ref,
                      w5_ref, b5_ref, wu_ref, bu_ref, wv_ref, bv_ref,
                      ws_ref, bs_ref, out_ref):
    bf = jnp.bfloat16
    g = g_ref[...].astype(bf)
    h1 = jnp.maximum(
        jnp.dot(g, w1_ref[...], preferred_element_type=jnp.float32) + b1_ref[...], 0.0)
    h2 = jnp.maximum(
        jnp.dot(h1.astype(bf), w2_ref[...], preferred_element_type=jnp.float32)
        + b2_ref[...], 0.0)
    h3 = jnp.maximum(
        jnp.dot(h2.astype(bf), w3_ref[...], preferred_element_type=jnp.float32)
        + b3_ref[...], 0.0)
    h4 = jnp.maximum(
        jnp.dot(h2.astype(bf), w5_ref[...], preferred_element_type=jnp.float32)
        + b5_ref[...], 0.0)

    # fc4 vertex-0 / vertex-1 projections, duplicated in lanes 0..29 and 30..59.
    u = jnp.dot(h3.astype(bf), wu_ref[...], preferred_element_type=jnp.float32) + bu_ref[...]
    v = jnp.dot(h3.astype(bf), wv_ref[...], preferred_element_type=jnp.float32) + bv_ref[...]
    # fc6 bbox-score logits living in lanes 60..69.
    s = jnp.dot(h4.astype(bf), ws_ref[...], preferred_element_type=jnp.float32) + bs_ref[...]

    lane = jax.lax.broadcasted_iota(jnp.int32, u.shape, 1)
    mnmx = jnp.where(lane < 30, jnp.minimum(u, v), jnp.maximum(u, v))
    sig = _sigmoid(s)
    out_ref[...] = jnp.where(lane < 60, mnmx, jnp.where(lane < 70, sig, 0.0))


def bbox_head(g2d, p):
    B = g2d.shape[0]
    inputs = [g2d,
              p["w1"], p["b1"], p["w2"], p["b2"], p["w3"], p["b3"],
              p["w5"], p["b5"],
              p["w4u"], p["b4u"], p["w4v"], p["b4v"], p["w6s"], p["b6s"]]
    return pl.pallas_call(
        _bbox_head_kernel,
        out_shape=jax.ShapeDtypeStruct((B, 128), jnp.float32),
        grid=(1,),
        in_specs=[_full_spec(x.shape) for x in inputs],
        out_specs=_full_spec((B, 128)),
        compiler_params=pltpu.CompilerParams(dimension_semantics=("arbitrary",)),
    )(*inputs)


# ---------------------------------------------------------------------------
# Kernel 2: semantic-seg branch in NCL layout.
#   conv1(1x1) -> folded BN -> ReLU -> (dropout=id) -> conv2(1x1) -> sigmoid
# x tile: (64, L_tile), channels on sublanes, points on lanes.
# ---------------------------------------------------------------------------
def _semseg_kernel(x_ref, w1_ref, scale_ref, shift_ref, w2_ref, b2_ref, o_ref):
    x = x_ref[0]                                                       # (64, Lt)
    h = jnp.dot(w1_ref[...], x, preferred_element_type=jnp.float32)    # (128, Lt)
    h = jnp.maximum(h * scale_ref[...] + shift_ref[...], 0.0)          # BN + ReLU
    # drop1: identity under eval semantics
    y = jnp.dot(w2_ref[...], h, preferred_element_type=jnp.float32) + b2_ref[...]  # (1, Lt)
    o_ref[...] = _sigmoid(y)[None]                                     # (1, 1, Lt)


def _pick_l_tile(L_padded):
    for t in (2048, 1024, 512, 256, 128):
        if L_padded % t == 0:
            return t
    return 128


def semseg_head(point_features, p):
    B, C, L = point_features.shape
    Lp = ((L + 127) // 128) * 128
    if Lp != L:
        point_features = jnp.pad(point_features, ((0, 0), (0, 0), (0, Lp - L)))
    lt = _pick_l_tile(Lp)
    grid = (B, Lp // lt)
    out = pl.pallas_call(
        _semseg_kernel,
        out_shape=jax.ShapeDtypeStruct((B, 1, Lp), jnp.float32),
        grid=grid,
        in_specs=[
            pl.BlockSpec((1, C, lt), lambda b, l: (b, 0, l)),
            pl.BlockSpec((128, C), lambda b, l: (0, 0)),
            pl.BlockSpec((128, 1), lambda b, l: (0, 0)),
            pl.BlockSpec((128, 1), lambda b, l: (0, 0)),
            pl.BlockSpec((1, 128), lambda b, l: (0, 0)),
            pl.BlockSpec((1, 1), lambda b, l: (0, 0)),
        ],
        out_specs=pl.BlockSpec((1, 1, lt), lambda b, l: (b, 0, l)),
        compiler_params=pltpu.CompilerParams(
            dimension_semantics=("parallel", "parallel")),
    )(point_features, p["cw1"], p["bn_scale"], p["bn_shift"], p["cw2"], p["cb2"])
    if Lp != L:
        out = out[:, :, :L]
    return out


# ---------------------------------------------------------------------------
# Parameter init (deterministic, PyTorch-default-like uniform ranges)
# ---------------------------------------------------------------------------
def init_params(key):
    ks = jax.random.split(key, 12)

    def lin(k, fan_in, fan_out):
        kw, kb = jax.random.split(k)
        bound = 1.0 / jnp.sqrt(float(fan_in))
        w = jax.random.uniform(kw, (fan_in, fan_out), jnp.float32, -bound, bound)
        b = jax.random.uniform(kb, (1, fan_out), jnp.float32, -bound, bound)
        return w, b

    bf = lambda w: w.astype(jnp.bfloat16)
    p = {}

    w1, b1 = lin(ks[0], IN_CHANNELS, 512)
    w2, b2 = lin(ks[1], 512, 256)
    w3, b3 = lin(ks[2], 256, 256)
    w4, b4 = lin(ks[3], 256, MAX_INS * 2 * 3)
    w5, b5 = lin(ks[4], 256, 256)
    w6, b6 = lin(ks[5], 256, MAX_INS)

    p["w1"], p["b1"] = bf(w1), b1
    p["w2"], p["b2"] = bf(w2), b2
    p["w3"], p["b3"] = bf(w3), b3
    p["w5"], p["b5"] = bf(w5), b5

    # fc4 column o maps to (i, pnt, d) with o = i*6 + pnt*3 + d after .view().
    idx0 = jnp.array([i * 6 + d for i in range(MAX_INS) for d in range(3)], jnp.int32)
    idx1 = idx0 + 3
    nv = MAX_INS * 3  # 30

    def pack_cols(w_cols, b_cols, lo0, lo1=None):
        W = jnp.zeros((w_cols.shape[0], 128), jnp.float32).at[:, lo0:lo0 + w_cols.shape[1]].set(w_cols)
        Bv = jnp.zeros((1, 128), jnp.float32).at[:, lo0:lo0 + w_cols.shape[1]].set(b_cols)
        if lo1 is not None:
            W = W.at[:, lo1:lo1 + w_cols.shape[1]].set(w_cols)
            Bv = Bv.at[:, lo1:lo1 + w_cols.shape[1]].set(b_cols)
        return W, Bv

    # vertex-0 / vertex-1 columns duplicated into lanes [0:30] and [30:60]
    W4u, b4u = pack_cols(w4[:, idx0], b4[:, idx0], 0, nv)
    W4v, b4v = pack_cols(w4[:, idx1], b4[:, idx1], 0, nv)
    # fc6 score columns in lanes [60:70]
    W6s, b6s = pack_cols(w6, b6, 2 * nv)

    p["w4u"], p["b4u"] = bf(W4u), b4u
    p["w4v"], p["b4v"] = bf(W4v), b4v
    p["w6s"], p["b6s"] = bf(W6s), b6s

    # conv1: 1x1 Conv1d(64 -> 128); bn1: BatchNorm1d(128); conv2: 1x1 Conv1d(128 -> 1)
    cw1, cb1 = lin(ks[6], 64, 128)
    gamma = 1.0 + 0.1 * jax.random.normal(ks[7], (1, 128), jnp.float32)
    beta = 0.1 * jax.random.normal(ks[8], (1, 128), jnp.float32)
    r_mean = 0.05 * jax.random.normal(ks[9], (1, 128), jnp.float32)
    r_var = jnp.abs(1.0 + 0.1 * jax.random.normal(ks[10], (1, 128), jnp.float32))
    scale = gamma / jnp.sqrt(r_var + BN_EPS)
    p["cw1"] = cw1.T                                       # (128, 64)  out x in
    p["bn_scale"] = scale.T                                # (128, 1)
    p["bn_shift"] = ((cb1 - r_mean) * scale + beta).T      # (128, 1)
    cw2, cb2 = lin(ks[11], 128, 1)
    p["cw2"] = cw2.T                                       # (1, 128)
    p["cb2"] = cb2                                         # (1, 1)
    return p


# ---------------------------------------------------------------------------
# Forward (mirrors PointCloudInstanceSegHead.forward, eval semantics)
# ---------------------------------------------------------------------------
def forward(point_features, global_features, params):
    B = global_features.shape[0]
    g2d = global_features.reshape(B, IN_CHANNELS)

    packed = bbox_head(g2d, params)                  # (B, 128) lane-dense slab
    nv = MAX_INS * 3
    mn = packed[:, 0:nv].reshape(B, MAX_INS, 3)
    mx = packed[:, nv:2 * nv].reshape(B, MAX_INS, 3)
    sc = packed[:, 2 * nv:2 * nv + MAX_INS]
    pred_bbox = jnp.stack([mn, mx], axis=2)          # (B, max_ins, 2, 3)
    pred_bbox_score = sc.reshape(B, 1, MAX_INS)      # (B, 1, max_ins)

    pred_sem_seg = semseg_head(point_features, params)   # (B, 1, L)

    # TODO(synk): forward_ins is not implemented: the reference uses self.bn2 /
    # self.conv2_ins which are never defined in __init__, and its channel shapes
    # (fc1 in=512 vs fc1_ins in=2048, bn1(128) applied to 2048 channels) are
    # mutually inconsistent, so it cannot run in PyTorch either.
    pred_ins_mask = None
    return pred_bbox, pred_bbox_score, pred_sem_seg, pred_ins_mask


if __name__ == "__main__":
    key = jax.random.PRNGKey(0)
    kp, kg, kx = jax.random.split(key, 3)
    params = init_params(kp)

    B, L = 2, 256
    global_features = jax.random.normal(kg, (B, 1, IN_CHANNELS), jnp.float32)
    point_features = jax.random.normal(kx, (B, 64, L), jnp.float32)

    pred_bbox, pred_bbox_score, pred_sem_seg, _ = forward(
        point_features, global_features, params)
    jax.block_until_ready((pred_bbox, pred_bbox_score, pred_sem_seg))

    assert pred_bbox.shape == (B, MAX_INS, 2, 3)
    assert pred_bbox_score.shape == (B, 1, MAX_INS)
    assert pred_sem_seg.shape == (B, 1, L)
    assert bool(jnp.all(pred_bbox[:, :, 0, :] <= pred_bbox[:, :, 1, :]))
    # approx-reciprocal sigmoid: allow tiny tolerance on the [0, 1] range.
    assert bool(jnp.all((pred_sem_seg > -1e-3) & (pred_sem_seg < 1.0 + 1e-3)))
    print("KERNEL_OK")
</pallas_src>

<mosaic_0001>
module attributes {stable_mosaic.version = 11 : i64} {
  func.func @_bbox_head_kernel(%arg0: i32, %arg1: memref<2x512xf32, #tpu.memory_space<vmem>>, %arg2: memref<512x512xbf16, #tpu.memory_space<vmem>>, %arg3: memref<1x512xf32, #tpu.memory_space<vmem>>, %arg4: memref<512x256xbf16, #tpu.memory_space<vmem>>, %arg5: memref<1x256xf32, #tpu.memory_space<vmem>>, %arg6: memref<256x256xbf16, #tpu.memory_space<vmem>>, %arg7: memref<1x256xf32, #tpu.memory_space<vmem>>, %arg8: memref<256x256xbf16, #tpu.memory_space<vmem>>, %arg9: memref<1x256xf32, #tpu.memory_space<vmem>>, %arg10: memref<256x128xbf16, #tpu.memory_space<vmem>>, %arg11: memref<1x128xf32, #tpu.memory_space<vmem>>, %arg12: memref<256x128xbf16, #tpu.memory_space<vmem>>, %arg13: memref<1x128xf32, #tpu.memory_space<vmem>>, %arg14: memref<256x128xbf16, #tpu.memory_space<vmem>>, %arg15: memref<1x128xf32, #tpu.memory_space<vmem>>, %arg16: memref<2x128xf32, #tpu.memory_space<vmem>>) attributes {dimension_semantics = [#tpu.dimension_semantics<arbitrary>], iteration_bounds = array<i64: 1>, scalar_prefetch = 0 : i64, scratch_operands = 0 : i64, tpu.core_type = #tpu.core_type<tc>, window_params = [{pipeline_mode = #tpu.pipeline_mode<synchronous>, transform_indices = @transform_0, window_bounds = array<i64: 2, 512>}, {pipeline_mode = #tpu.pipeline_mode<synchronous>, transform_indices = @transform_1, window_bounds = array<i64: 512, 512>}, {pipeline_mode = #tpu.pipeline_mode<synchronous>, transform_indices = @transform_2, window_bounds = array<i64: 1, 512>}, {pipeline_mode = #tpu.pipeline_mode<synchronous>, transform_indices = @transform_3, window_bounds = array<i64: 512, 256>}, {pipeline_mode = #tpu.pipeline_mode<synchronous>, transform_indices = @transform_4, window_bounds = array<i64: 1, 256>}, {pipeline_mode = #tpu.pipeline_mode<synchronous>, transform_indices = @transform_5, window_bounds = array<i64: 256, 256>}, {pipeline_mode = #tpu.pipeline_mode<synchronous>, transform_indices = @transform_6, window_bounds = array<i64: 1, 256>}, {pipeline_mode = #tpu.pipeline_mode<synchronous>, transform_indices = @transform_7, window_bounds = array<i64: 256, 256>}, {pipeline_mode = #tpu.pipeline_mode<synchronous>, transform_indices = @transform_8, window_bounds = array<i64: 1, 256>}, {pipeline_mode = #tpu.pipeline_mode<synchronous>, transform_indices = @transform_9, window_bounds = array<i64: 256, 128>}, {pipeline_mode = #tpu.pipeline_mode<synchronous>, transform_indices = @transform_10, window_bounds = array<i64: 1, 128>}, {pipeline_mode = #tpu.pipeline_mode<synchronous>, transform_indices = @transform_11, window_bounds = array<i64: 256, 128>}, {pipeline_mode = #tpu.pipeline_mode<synchronous>, transform_indices = @transform_12, window_bounds = array<i64: 1, 128>}, {pipeline_mode = #tpu.pipeline_mode<synchronous>, transform_indices = @transform_13, window_bounds = array<i64: 256, 128>}, {pipeline_mode = #tpu.pipeline_mode<synchronous>, transform_indices = @transform_14, window_bounds = array<i64: 1, 128>}, {pipeline_mode = #tpu.pipeline_mode<synchronous>, transform_indices = @transform_15, window_bounds = array<i64: 2, 128>}]} {
    %c0 = arith.constant 0 : index
    %c0_0 = arith.constant 0 : index
    %0 = vector.load %arg1[%c0, %c0_0] : memref<2x512xf32, #tpu.memory_space<vmem>>, vector<2x512xf32>
    %1 = arith.truncf %0 : vector<2x512xf32> to vector<2x512xbf16>
    %c0_1 = arith.constant 0 : index
    %c0_2 = arith.constant 0 : index
    %2 = vector.load %arg2[%c0_1, %c0_2] : memref<512x512xbf16, #tpu.memory_space<vmem>>, vector<512x512xbf16>
    %cst = arith.constant dense<0.000000e+00> : vector<2x512xf32>
    %3 = tpu.matmul %1, %2, %cst {dimension_numbers = #tpu.dot_dimension_numbers<[1], [0], [0], [1], [0, 0, 1, 1], [], []>} : vector<2x512xbf16>, vector<512x512xbf16>, vector<2x512xf32> -> vector<2x512xf32>
    %c0_3 = arith.constant 0 : index
    %c0_4 = arith.constant 0 : index
    %4 = vector.load %arg3[%c0_3, %c0_4] : memref<1x512xf32, #tpu.memory_space<vmem>>, vector<1x512xf32>
    %5 = vector.broadcast %4 : vector<1x512xf32> to vector<2x512xf32>
    %6 = arith.addf %3, %5 : vector<2x512xf32>
    %cst_5 = arith.constant 0.000000e+00 : f32
    %7 = vector.broadcast %cst_5 : f32 to vector<2x512xf32>
    %8 = arith.maximumf %6, %7 : vector<2x512xf32>
    %9 = arith.truncf %8 : vector<2x512xf32> to vector<2x512xbf16>
    %c0_6 = arith.constant 0 : index
    %c0_7 = arith.constant 0 : index
    %10 = vector.load %arg4[%c0_6, %c0_7] : memref<512x256xbf16, #tpu.memory_space<vmem>>, vector<512x256xbf16>
    %cst_8 = arith.constant dense<0.000000e+00> : vector<2x256xf32>
    %11 = tpu.matmul %9, %10, %cst_8 {dimension_numbers = #tpu.dot_dimension_numbers<[1], [0], [0], [1], [0, 0, 1, 1], [], []>} : vector<2x512xbf16>, vector<512x256xbf16>, vector<2x256xf32> -> vector<2x256xf32>
    %c0_9 = arith.constant 0 : index
    %c0_10 = arith.constant 0 : index
    %12 = vector.load %arg5[%c0_9, %c0_10] : memref<1x256xf32, #tpu.memory_space<vmem>>, vector<1x256xf32>
    %13 = vector.broadcast %12 : vector<1x256xf32> to vector<2x256xf32>
    %14 = arith.addf %11, %13 : vector<2x256xf32>
    %cst_11 = arith.constant 0.000000e+00 : f32
    %15 = vector.broadcast %cst_11 : f32 to vector<2x256xf32>
    %16 = arith.maximumf %14, %15 : vector<2x256xf32>
    %17 = arith.truncf %16 : vector<2x256xf32> to vector<2x256xbf16>
    %c0_12 = arith.constant 0 : index
    %c0_13 = arith.constant 0 : index
    %18 = vector.load %arg6[%c0_12, %c0_13] : memref<256x256xbf16, #tpu.memory_space<vmem>>, vector<256x256xbf16>
    %cst_14 = arith.constant dense<0.000000e+00> : vector<2x256xf32>
    %19 = tpu.matmul %17, %18, %cst_14 {dimension_numbers = #tpu.dot_dimension_numbers<[1], [0], [0], [1], [0, 0, 1, 1], [], []>} : vector<2x256xbf16>, vector<256x256xbf16>, vector<2x256xf32> -> vector<2x256xf32>
    %c0_15 = arith.constant 0 : index
    %c0_16 = arith.constant 0 : index
    %20 = vector.load %arg7[%c0_15, %c0_16] : memref<1x256xf32, #tpu.memory_space<vmem>>, vector<1x256xf32>
    %21 = vector.broadcast %20 : vector<1x256xf32> to vector<2x256xf32>
    %22 = arith.addf %19, %21 : vector<2x256xf32>
    %cst_17 = arith.constant 0.000000e+00 : f32
    %23 = vector.broadcast %cst_17 : f32 to vector<2x256xf32>
    %24 = arith.maximumf %22, %23 : vector<2x256xf32>
    %25 = arith.truncf %16 : vector<2x256xf32> to vector<2x256xbf16>
    %c0_18 = arith.constant 0 : index
    %c0_19 = arith.constant 0 : index
    %26 = vector.load %arg8[%c0_18, %c0_19] : memref<256x256xbf16, #tpu.memory_space<vmem>>, vector<256x256xbf16>
    %cst_20 = arith.constant dense<0.000000e+00> : vector<2x256xf32>
    %27 = tpu.matmul %25, %26, %cst_20 {dimension_numbers = #tpu.dot_dimension_numbers<[1], [0], [0], [1], [0, 0, 1, 1], [], []>} : vector<2x256xbf16>, vector<256x256xbf16>, vector<2x256xf32> -> vector<2x256xf32>
    %c0_21 = arith.constant 0 : index
    %c0_22 = arith.constant 0 : index
    %28 = vector.load %arg9[%c0_21, %c0_22] : memref<1x256xf32, #tpu.memory_space<vmem>>, vector<1x256xf32>
    %29 = vector.broadcast %28 : vector<1x256xf32> to vector<2x256xf32>
    %30 = arith.addf %27, %29 : vector<2x256xf32>
    %cst_23 = arith.constant 0.000000e+00 : f32
    %31 = vector.broadcast %cst_23 : f32 to vector<2x256xf32>
    %32 = arith.maximumf %30, %31 : vector<2x256xf32>
    %33 = arith.truncf %24 : vector<2x256xf32> to vector<2x256xbf16>
    %c0_24 = arith.constant 0 : index
    %c0_25 = arith.constant 0 : index
    %34 = vector.load %arg10[%c0_24, %c0_25] : memref<256x128xbf16, #tpu.memory_space<vmem>>, vector<256x128xbf16>
    %cst_26 = arith.constant dense<0.000000e+00> : vector<2x128xf32>
    %35 = tpu.matmul %33, %34, %cst_26 {dimension_numbers = #tpu.dot_dimension_numbers<[1], [0], [0], [1], [0, 0, 1, 1], [], []>} : vector<2x256xbf16>, vector<256x128xbf16>, vector<2x128xf32> -> vector<2x128xf32>
    %c0_27 = arith.constant 0 : index
    %c0_28 = arith.constant 0 : index
    %36 = vector.load %arg11[%c0_27, %c0_28] : memref<1x128xf32, #tpu.memory_space<vmem>>, vector<1x128xf32>
    %37 = vector.broadcast %36 : vector<1x128xf32> to vector<2x128xf32>
    %38 = arith.addf %35, %37 : vector<2x128xf32>
    %39 = arith.truncf %24 : vector<2x256xf32> to vector<2x256xbf16>
    %c0_29 = arith.constant 0 : index
    %c0_30 = arith.constant 0 : index
    %40 = vector.load %arg12[%c0_29, %c0_30] : memref<256x128xbf16, #tpu.memory_space<vmem>>, vector<256x128xbf16>
    %cst_31 = arith.constant dense<0.000000e+00> : vector<2x128xf32>
    %41 = tpu.matmul %39, %40, %cst_31 {dimension_numbers = #tpu.dot_dimension_numbers<[1], [0], [0], [1], [0, 0, 1, 1], [], []>} : vector<2x256xbf16>, vector<256x128xbf16>, vector<2x128xf32> -> vector<2x128xf32>
    %c0_32 = arith.constant 0 : index
    %c0_33 = arith.constant 0 : index
    %42 = vector.load %arg13[%c0_32, %c0_33] : memref<1x128xf32, #tpu.memory_space<vmem>>, vector<1x128xf32>
    %43 = vector.broadcast %42 : vector<1x128xf32> to vector<2x128xf32>
    %44 = arith.addf %41, %43 : vector<2x128xf32>
    %45 = arith.truncf %32 : vector<2x256xf32> to vector<2x256xbf16>
    %c0_34 = arith.constant 0 : index
    %c0_35 = arith.constant 0 : index
    %46 = vector.load %arg14[%c0_34, %c0_35] : memref<256x128xbf16, #tpu.memory_space<vmem>>, vector<256x128xbf16>
    %cst_36 = arith.constant dense<0.000000e+00> : vector<2x128xf32>
    %47 = tpu.matmul %45, %46, %cst_36 {dimension_numbers = #tpu.dot_dimension_numbers<[1], [0], [0], [1], [0, 0, 1, 1], [], []>} : vector<2x256xbf16>, vector<256x128xbf16>, vector<2x128xf32> -> vector<2x128xf32>
    %c0_37 = arith.constant 0 : index
    %c0_38 = arith.constant 0 : index
    %48 = vector.load %arg15[%c0_37, %c0_38] : memref<1x128xf32, #tpu.memory_space<vmem>>, vector<1x128xf32>
    %49 = vector.broadcast %48 : vector<1x128xf32> to vector<2x128xf32>
    %50 = arith.addf %47, %49 : vector<2x128xf32>
    %51 = tpu.iota {dimensions = array<i32: 1>} : vector<2x128xi32>
    %c30_i32 = arith.constant 30 : i32
    %52 = vector.broadcast %c30_i32 : i32 to vector<2x128xi32>
    %53 = arith.cmpi slt, %51, %52 : vector<2x128xi32>
    %54 = arith.minimumf %38, %44 : vector<2x128xf32>
    %55 = arith.maximumf %38, %44 : vector<2x128xf32>
    %56 = arith.select %53, %54, %55 : vector<2x128xi1>, vector<2x128xf32>
    %cst_39 = arith.constant 0.000000e+00 : f32
    %57 = vector.broadcast %cst_39 : f32 to vector<2x128xf32>
    %58 = arith.subf %57, %50 : vector<2x128xf32>
    %59 = math.exp %58 : vector<2x128xf32>
    %cst_40 = arith.constant 1.000000e+00 : f32
    %60 = vector.broadcast %cst_40 : f32 to vector<2x128xf32>
    %61 = arith.addf %60, %59 : vector<2x128xf32>
    %62 = tpu.reciprocal %61 {approx = true} : vector<2x128xf32> -> vector<2x128xf32>
    %c60_i32 = arith.constant 60 : i32
    %63 = vector.broadcast %c60_i32 : i32 to vector<2x128xi32>
    %64 = arith.cmpi slt, %51, %63 : vector<2x128xi32>
    %c70_i32 = arith.constant 70 : i32
    %65 = vector.broadcast %c70_i32 : i32 to vector<2x128xi32>
    %66 = arith.cmpi slt, %51, %65 : vector<2x128xi32>
    %cst_41 = arith.constant 0.000000e+00 : f32
    %67 = vector.broadcast %cst_41 : f32 to vector<2x128xf32>
    %68 = arith.select %66, %62, %67 : vector<2x128xi1>, vector<2x128xf32>
    %69 = arith.select %64, %56, %68 : vector<2x128xi1>, vector<2x128xf32>
    %c0_42 = arith.constant 0 : index
    %c0_43 = arith.constant 0 : index
    %70 = vector.load %arg16[%c0_42, %c0_43] : memref<2x128xf32, #tpu.memory_space<vmem>>, vector<2x128xf32>
    tpu.vector_store %arg16[%c0_42, %c0_43], %69 {strides = array<i32>} : memref<2x128xf32, #tpu.memory_space<vmem>>, vector<2x128xf32>,
    return
  }
  func.func @transform_0(%arg0: i32) -> (i32, i32) {
    %c0_i32 = arith.constant 0 : i32
    %c0_i32_0 = arith.constant 0 : i32
    %c0_i32_1 = arith.constant 0 : i32
    return %c0_i32, %c0_i32_0 : i32, i32
  }
  func.func @transform_1(%arg0: i32) -> (i32, i32) {
    %c0_i32 = arith.constant 0 : i32
    %c0_i32_0 = arith.constant 0 : i32
    %c0_i32_1 = arith.constant 0 : i32
    return %c0_i32, %c0_i32_0 : i32, i32
  }
  func.func @transform_2(%arg0: i32) -> (i32, i32) {
    %c0_i32 = arith.constant 0 : i32
    %c0_i32_0 = arith.constant 0 : i32
    %c0_i32_1 = arith.constant 0 : i32
    return %c0_i32, %c0_i32_0 : i32, i32
  }
  func.func @transform_3(%arg0: i32) -> (i32, i32) {
    %c0_i32 = arith.constant 0 : i32
    %c0_i32_0 = arith.constant 0 : i32
    %c0_i32_1 = arith.constant 0 : i32
    return %c0_i32, %c0_i32_0 : i32, i32
  }
  func.func @transform_4(%arg0: i32) -> (i32, i32) {
    %c0_i32 = arith.constant 0 : i32
    %c0_i32_0 = arith.constant 0 : i32
    %c0_i32_1 = arith.constant 0 : i32
    return %c0_i32, %c0_i32_0 : i32, i32
  }
  func.func @transform_5(%arg0: i32) -> (i32, i32) {
    %c0_i32 = arith.constant 0 : i32
    %c0_i32_0 = arith.constant 0 : i32
    %c0_i32_1 = arith.constant 0 : i32
    return %c0_i32, %c0_i32_0 : i32, i32
  }
  func.func @transform_6(%arg0: i32) -> (i32, i32) {
    %c0_i32 = arith.constant 0 : i32
    %c0_i32_0 = arith.constant 0 : i32
    %c0_i32_1 = arith.constant 0 : i32
    return %c0_i32, %c0_i32_0 : i32, i32
  }
  func.func @transform_7(%arg0: i32) -> (i32, i32) {
    %c0_i32 = arith.constant 0 : i32
    %c0_i32_0 = arith.constant 0 : i32
    %c0_i32_1 = arith.constant 0 : i32
    return %c0_i32, %c0_i32_0 : i32, i32
  }
  func.func @transform_8(%arg0: i32) -> (i32, i32) {
    %c0_i32 = arith.constant 0 : i32
    %c0_i32_0 = arith.constant 0 : i32
    %c0_i32_1 = arith.constant 0 : i32
    return %c0_i32, %c0_i32_0 : i32, i32
  }
  func.func @transform_9(%arg0: i32) -> (i32, i32) {
    %c0_i32 = arith.constant 0 : i32
    %c0_i32_0 = arith.constant 0 : i32
    %c0_i32_1 = arith.constant 0 : i32
    return %c0_i32, %c0_i32_0 : i32, i32
  }
  func.func @transform_10(%arg0: i32) -> (i32, i32) {
    %c0_i32 = arith.constant 0 : i32
    %c0_i32_0 = arith.constant 0 : i32
    %c0_i32_1 = arith.constant 0 : i32
    return %c0_i32, %c0_i32_0 : i32, i32
  }
  func.func @transform_11(%arg0: i32) -> (i32, i32) {
    %c0_i32 = arith.constant 0 : i32
    %c0_i32_0 = arith.constant 0 : i32
    %c0_i32_1 = arith.constant 0 : i32
    return %c0_i32, %c0_i32_0 : i32, i32
  }
  func.func @transform_12(%arg0: i32) -> (i32, i32) {
    %c0_i32 = arith.constant 0 : i32
    %c0_i32_0 = arith.constant 0 : i32
    %c0_i32_1 = arith.constant 0 : i32
    return %c0_i32, %c0_i32_0 : i32, i32
  }
  func.func @transform_13(%arg0: i32) -> (i32, i32) {
    %c0_i32 = arith.constant 0 : i32
    %c0_i32_0 = arith.constant 0 : i32
    %c0_i32_1 = arith.constant 0 : i32
    return %c0_i32, %c0_i32_0 : i32, i32
  }
  func.func @transform_14(%arg0: i32) -> (i32, i32) {
    %c0_i32 = arith.constant 0 : i32
    %c0_i32_0 = arith.constant 0 : i32
    %c0_i32_1 = arith.constant 0 : i32
    return %c0_i32, %c0_i32_0 : i32, i32
  }
  func.func @transform_15(%arg0: i32) -> (i32, i32) {
    %c0_i32 = arith.constant 0 : i32
    %c0_i32_0 = arith.constant 0 : i32
    %c0_i32_1 = arith.constant 0 : i32
    return %c0_i32, %c0_i32_0 : i32, i32
  }
}

</mosaic_0001>

<llo_original>
// kernel: tpu_custom_call.1
$region0: #{tpu_custom_call.1}
  #allocation0 [shape = 'u32[]', space=smem, size = 0x4, offset = 0x4, fixed_abs, tag = 'smem constant byte address 0x4 - core index']
  #allocation1 [shape = 'u32[144,128]{1,0:T(1,128)}', space=vmem, size = 0x12000, scoped, tag = 'internal scratch']
  %s0 = inlined_call_operand.hbm [shape: f32[2,512], index: 0, kind: input, shape index: {}]
  %s1 = inlined_call_operand.hbm [shape: bf16[512,512], index: 1, kind: input, shape index: {}]
  %s2 = inlined_call_operand.vmem [shape: f32[1,512], index: 2, kind: input, shape index: {}]
  %s3 = inlined_call_operand.hbm [shape: bf16[512,256], index: 3, kind: input, shape index: {}]
  %s4 = inlined_call_operand.vmem [shape: f32[1,256], index: 4, kind: input, shape index: {}]
  %s5 = inlined_call_operand.hbm [shape: bf16[256,256], index: 5, kind: input, shape index: {}]
  %s6 = inlined_call_operand.vmem [shape: f32[1,256], index: 6, kind: input, shape index: {}]
  %s7 = inlined_call_operand.hbm [shape: bf16[256,256], index: 7, kind: input, shape index: {}]
  %s8 = inlined_call_operand.vmem [shape: f32[1,256], index: 8, kind: input, shape index: {}]
  %s9 = inlined_call_operand.hbm [shape: bf16[256,128], index: 9, kind: input, shape index: {}]
  %s10 = inlined_call_operand.vmem [shape: f32[1,128], index: 10, kind: input, shape index: {}]
  %s11 = inlined_call_operand.hbm [shape: bf16[256,128], index: 11, kind: input, shape index: {}]
  %s12 = inlined_call_operand.vmem [shape: f32[1,128], index: 12, kind: input, shape index: {}]
  %s13 = inlined_call_operand.hbm [shape: bf16[256,128], index: 13, kind: input, shape index: {}]
  %s14 = inlined_call_operand.vmem [shape: f32[1,128], index: 14, kind: input, shape index: {}]
  %s15 = inlined_call_operand.hbm [shape: f32[2,128], index: 15, kind: output, shape index: {}]
  %s16 = sld [smem:[#allocation0]]
  $region102: #{tpu_custom_call.1} parent=0
    _
  %s18 = ssub.s32 1, %s16
  %s19 = scalar_select 0, %s18, %s16
  $region1: #{tpu_custom_call.1} parent=0
    #allocation2 [shape = 'u8[4096]{0}', space=vmem, size = 0x1000, scoped, tag = 'input window, operand 0, single buffered']
    #allocation3 [shape = 's32[1]{0}', space=sflag, size = 0x4, scoped, tag = 'scoped memory for tpu_custom_call.1']
    #allocation4 [shape = 's32[1]{0}', space=sflag, size = 0x4, scoped, tag = 'scoped memory for tpu_custom_call.1']
    #allocation5 [shape = 'u8[524288]{0}', space=vmem, size = 0x80000, scoped, tag = 'input window, operand 1, single buffered']
    #allocation6 [shape = 's32[1]{0}', space=sflag, size = 0x4, scoped, tag = 'scoped memory for tpu_custom_call.1']
    #allocation7 [shape = 'u8[262144]{0}', space=vmem, size = 0x40000, scoped, tag = 'input window, operand 3, single buffered']
    #allocation8 [shape = 'u8[131072]{0}', space=vmem, size = 0x20000, scoped, tag = 'input window, operand 5, single buffered']
    #allocation9 [shape = 's32[1]{0}', space=sflag, size = 0x4, scoped, tag = 'scoped memory for tpu_custom_call.1']
    #allocation10 [shape = 'u8[131072]{0}', space=vmem, size = 0x20000, scoped, tag = 'input window, operand 7, single buffered']
    #allocation11 [shape = 'u8[65536]{0}', space=vmem, size = 0x10000, scoped, tag = 'input window, operand 9, single buffered']
    #allocation12 [shape = 's32[1]{0}', space=sflag, size = 0x4, scoped, tag = 'scoped memory for tpu_custom_call.1']
    #allocation13 [shape = 'u8[65536]{0}', space=vmem, size = 0x10000, scoped, tag = 'input window, operand 11, single buffered']
    #allocation14 [shape = 'u8[65536]{0}', space=vmem, size = 0x10000, scoped, tag = 'input window, operand 13, single buffered']
    #allocation15 [shape = 's32[1]{0}', space=sflag, size = 0x4, scoped, tag = 'scoped memory for tpu_custom_call.1']
    #allocation16 [shape = 'u8[1024]{0}', space=vmem, size = 0x400, scoped, tag = 'output window, operand 0, single buffered']
    %20 = vsyncpa [#allocation3], 0
    %21 = vsyncpa [#allocation6], 0
    %22 = vsyncpa [#allocation9], 0
    %23 = vsyncpa [#allocation12], 0
    %24 = vsyncpa [#allocation15], 0
    %25 = vsyncpa [#allocation4], 0
    // Predicated region
    $region2: #{tpu_custom_call.1} parent=1 // pred_check
      _
    $region3: #{tpu_custom_call.1} parent=1 // pred_check_branch
      %27 = sbr.rel (0) target = $region5
    $region4: #{tpu_custom_call.1} parent=1 // pred_region
      %s29 = ssub.s32 128, 128
      %30 = vsyncadd [#allocation3], %s29
      %s32 = sshll.u32 [#allocation2], 4
      %s33 = int_to_ptr.vmem [resolvable:$true] %s32
      %35 = dma.hbm_to_vmem [thread:$0]  %s0, 128, %s33, [#allocation3]
    $region5: #{tpu_custom_call.1} parent=1 // pred_fallthru
      _
    // Predicated region
    $region6: #{tpu_custom_call.1} parent=1 // pred_check
      _
    $region7: #{tpu_custom_call.1} parent=1 // pred_check_branch
      %37 = sbr.rel (0) target = $region9
    $region8: #{tpu_custom_call.1} parent=1 // pred_region
      %s39 = ssub.s32 16384, 16384
      %40 = vsyncadd [#allocation6], %s39
      %s41 = sshll.u32 [#allocation5], 4
      %s42 = int_to_ptr.vmem [resolvable:$true] %s41
      %47 = dma.hbm_to_vmem [thread:$0]  %s1, 16384, %s42, [#allocation6], 256, 256, 16
    $region9: #{tpu_custom_call.1} parent=1 // pred_fallthru
      _
    // Predicated region
    $region10: #{tpu_custom_call.1} parent=1 // pred_check
      _
    $region11: #{tpu_custom_call.1} parent=1 // pred_check_branch
      %49 = sbr.rel (0) target = $region13
    $region12: #{tpu_custom_call.1} parent=1 // pred_region
      _
    $region13: #{tpu_custom_call.1} parent=1 // pred_fallthru
      _
    // Predicated region
    $region14: #{tpu_custom_call.1} parent=1 // pred_check
      _
    $region15: #{tpu_custom_call.1} parent=1 // pred_check_branch
      %51 = sbr.rel (0) target = $region17
    $region16: #{tpu_custom_call.1} parent=1 // pred_region
      %s53 = ssub.s32 8192, 8192
      %54 = vsyncadd [#allocation6], %s53
      %s55 = sshll.u32 [#allocation7], 4
      %s56 = int_to_ptr.vmem [resolvable:$true] %s55
      %61 = dma.hbm_to_vmem [thread:$0]  %s3, 8192, %s56, [#allocation6], 128, 128, 8
    $region17: #{tpu_custom_call.1} parent=1 // pred_fallthru
      _
    // Predicated region
    $region18: #{tpu_custom_call.1} parent=1 // pred_check
      _
    $region19: #{tpu_custom_call.1} parent=1 // pred_check_branch
      %63 = sbr.rel (0) target = $region21
    $region20: #{tpu_custom_call.1} parent=1 // pred_region
      _
    $region21: #{tpu_custom_call.1} parent=1 // pred_fallthru
      _
    // Predicated region
    $region22: #{tpu_custom_call.1} parent=1 // pred_check
      _
    $region23: #{tpu_custom_call.1} parent=1 // pred_check_branch
      %65 = sbr.rel (0) target = $region25
    $region24: #{tpu_custom_call.1} parent=1 // pred_region
      %s67 = ssub.s32 4096, 4096
      %68 = vsyncadd [#allocation9], %s67
      %s69 = sshll.u32 [#allocation8], 4
      %s70 = int_to_ptr.vmem [resolvable:$true] %s69
      %75 = dma.hbm_to_vmem [thread:$0]  %s5, 4096, %s70, [#allocation9], 128, 128, 8
    $region25: #{tpu_custom_call.1} parent=1 // pred_fallthru
      _
    // Predicated region
    $region26: #{tpu_custom_call.1} parent=1 // pred_check
      _
    $region27: #{tpu_custom_call.1} parent=1 // pred_check_branch
      %77 = sbr.rel (0) target = $region29
    $region28: #{tpu_custom_call.1} parent=1 // pred_region
      _
    $region29: #{tpu_custom_call.1} parent=1 // pred_fallthru
      _
    // Predicated region
    $region30: #{tpu_custom_call.1} parent=1 // pred_check
      _
    $region31: #{tpu_custom_call.1} parent=1 // pred_check_branch
      %79 = sbr.rel (0) target = $region33
    $region32: #{tpu_custom_call.1} parent=1 // pred_region
      %s81 = ssub.s32 4096, 4096
      %82 = vsyncadd [#allocation9], %s81
      %s83 = sshll.u32 [#allocation10], 4
      %s84 = int_to_ptr.vmem [resolvable:$true] %s83
      %89 = dma.hbm_to_vmem [thread:$0]  %s7, 4096, %s84, [#allocation9], 128, 128, 8
    $region33: #{tpu_custom_call.1} parent=1 // pred_fallthru
      _
    // Predicated region
    $region34: #{tpu_custom_call.1} parent=1 // pred_check
      _
    $region35: #{tpu_custom_call.1} parent=1 // pred_check_branch
      %91 = sbr.rel (0) target = $region37
    $region36: #{tpu_custom_call.1} parent=1 // pred_region
      _
    $region37: #{tpu_custom_call.1} parent=1 // pred_fallthru
      _
    // Predicated region
    $region38: #{tpu_custom_call.1} parent=1 // pred_check
      _
    $region39: #{tpu_custom_call.1} parent=1 // pred_check_branch
      %93 = sbr.rel (0) target = $region41
    $region40: #{tpu_custom_call.1} parent=1 // pred_region
      %s95 = ssub.s32 2048, 2048
      %96 = vsyncadd [#allocation12], %s95
      %s97 = sshll.u32 [#allocation11], 4
      %s98 = int_to_ptr.vmem [resolvable:$true] %s97
      %103 = dma.hbm_to_vmem [thread:$0]  %s9, 2048, %s98, [#allocation12], 64, 64, 4
    $region41: #{tpu_custom_call.1} parent=1 // pred_fallthru
      _
    // Predicated region
    $region42: #{tpu_custom_call.1} parent=1 // pred_check
      _
    $region43: #{tpu_custom_call.1} parent=1 // pred_check_branch
      %105 = sbr.rel (0) target = $region45
    $region44: #{tpu_custom_call.1} parent=1 // pred_region
      _
    $region45: #{tpu_custom_call.1} parent=1 // pred_fallthru
      _
    // Predicated region
    $region46: #{tpu_custom_call.1} parent=1 // pred_check
      _
    $region47: #{tpu_custom_call.1} parent=1 // pred_check_branch
      %107 = sbr.rel (0) target = $region49
    $region48: #{tpu_custom_call.1} parent=1 // pred_region
      %s109 = ssub.s32 2048, 2048
      %110 = vsyncadd [#allocation12], %s109
      %s111 = sshll.u32 [#allocation13], 4
      %s112 = int_to_ptr.vmem [resolvable:$true] %s111
      %117 = dma.hbm_to_vmem [thread:$0]  %s11, 2048, %s112, [#allocation12], 64, 64, 4
    $region49: #{tpu_custom_call.1} parent=1 // pred_fallthru
      _
    // Predicated region
    $region50: #{tpu_custom_call.1} parent=1 // pred_check
      _
    $region51: #{tpu_custom_call.1} parent=1 // pred_check_branch
      %119 = sbr.rel (0) target = $region53
    $region52: #{tpu_custom_call.1} parent=1 // pred_region
      _
    $region53: #{tpu_custom_call.1} parent=1 // pred_fallthru
      _
    // Predicated region
    $region54: #{tpu_custom_call.1} parent=1 // pred_check
      _
    $region55: #{tpu_custom_call.1} parent=1 // pred_check_branch
      %121 = sbr.rel (0) target = $region57
    $region56: #{tpu_custom_call.1} parent=1 // pred_region
      %s123 = ssub.s32 2048, 2048
      %124 = vsyncadd [#allocation15], %s123
      %s125 = sshll.u32 [#allocation14], 4
      %s126 = int_to_ptr.vmem [resolvable:$true] %s125
      %131 = dma.hbm_to_vmem [thread:$0]  %s13, 2048, %s126, [#allocation15], 64, 64, 4
    $region57: #{tpu_custom_call.1} parent=1 // pred_fallthru
      _
    // Predicated region
    $region58: #{tpu_custom_call.1} parent=1 // pred_check
      _
    $region59: #{tpu_custom_call.1} parent=1 // pred_check_branch
      %133 = sbr.rel (0) target = $region61
    $region60: #{tpu_custom_call.1} parent=1 // pred_region
      _
    $region61: #{tpu_custom_call.1} parent=1 // pred_fallthru
      _
    // Predicated region
    $region62: #{tpu_custom_call.1} parent=1 // pred_check
      _
    $region63: #{tpu_custom_call.1} parent=1 // pred_check_branch
      %135 = sbr.rel (0) target = $region65
    $region64: #{tpu_custom_call.1} parent=1 // pred_region
      %136 = dma.done [#allocation3], 128
    $region65: #{tpu_custom_call.1} parent=1 // pred_fallthru
      _
    // Predicated region
    $region66: #{tpu_custom_call.1} parent=1 // pred_check
      _
    $region67: #{tpu_custom_call.1} parent=1 // pred_check_branch
      %138 = sbr.rel (0) target = $region69
    $region68: #{tpu_custom_call.1} parent=1 // pred_region
      %139 = dma.done [#allocation6], 16384
    $region69: #{tpu_custom_call.1} parent=1 // pred_fallthru
      _
    // Predicated region
    $region70: #{tpu_custom_call.1} parent=1 // pred_check
      _
    $region71: #{tpu_custom_call.1} parent=1 // pred_check_branch
      %141 = sbr.rel (0) target = $region73
    $region72: #{tpu_custom_call.1} parent=1 // pred_region
      %142 = dma.done [#allocation6], 8192
    $region73: #{tpu_custom_call.1} parent=1 // pred_fallthru
      _
    // Predicated region
    $region74: #{tpu_custom_call.1} parent=1 // pred_check
      _
    $region75: #{tpu_custom_call.1} parent=1 // pred_check_branch
      %144 = sbr.rel (0) target = $region77
    $region76: #{tpu_custom_call.1} parent=1 // pred_region
      %145 = dma.done [#allocation9], 4096
    $region77: #{tpu_custom_call.1} parent=1 // pred_fallthru
      _
    // Predicated region
    $region78: #{tpu_custom_call.1} parent=1 // pred_check
      _
    $region79: #{tpu_custom_call.1} parent=1 // pred_check_branch
      %147 = sbr.rel (0) target = $region81
    $region80: #{tpu_custom_call.1} parent=1 // pred_region
      %148 = dma.done [#allocation9], 4096
    $region81: #{tpu_custom_call.1} parent=1 // pred_fallthru
      _
    // Predicated region
    $region82: #{tpu_custom_call.1} parent=1 // pred_check
      _
    $region83: #{tpu_custom_call.1} parent=1 // pred_check_branch
      %150 = sbr.rel (0) target = $region85
    $region84: #{tpu_custom_call.1} parent=1 // pred_region
      %151 = dma.done [#allocation12], 2048
    $region85: #{tpu_custom_call.1} parent=1 // pred_fallthru
      _
    // Predicated region
    $region86: #{tpu_custom_call.1} parent=1 // pred_check
      _
    $region87: #{tpu_custom_call.1} parent=1 // pred_check_branch
      %153 = sbr.rel (0) target = $region89
    $region88: #{tpu_custom_call.1} parent=1 // pred_region
      %154 = dma.done [#allocation12], 2048
    $region89: #{tpu_custom_call.1} parent=1 // pred_fallthru
      _
    // Predicated region
    $region90: #{tpu_custom_call.1} parent=1 // pred_check
      _
    $region91: #{tpu_custom_call.1} parent=1 // pred_check_branch
      %156 = sbr.rel (0) target = $region93
    $region92: #{tpu_custom_call.1} parent=1 // pred_region
      %157 = dma.done [#allocation15], 2048
    $region93: #{tpu_custom_call.1} parent=1 // pred_fallthru
      _
    %v159 = vld [vmem:[#allocation2] sm:$0xff]
    %v161 = vcombine.high %v159, %v159
    %v163 = vunpack.c.l.s4 1983009808
    %v164 = vunpack.c.0.s8 %v163
    %v165 = vlaneseq
    %v166 = vshrl.u32 %v165, 7
    %v167 = vsub.s32 %v164, %v166
    %v168 = vrot.slane %v159, %v167
    %v170 = vunpack.c.l.s4 1983009808
    %v171 = vunpack.c.0.s8 %v170
    %v172 = vlaneseq
    %v173 = vshrl.u32 %v172, 7
    %v174 = vsub.s32 %v171, %v173
    %v175 = vrot.slane %v161, %v174
    %v176 = vcombine.high %v168, %v168
    %v177 = vcombine.high %v175, %v175
    %v182 = vpack.c.bf16 %v168, %v168
    %v183 = vpack.c.bf16 %v176, %v176
    %v184 = vpack.c.bf16 %v175, %v175
    %v185 = vpack.c.bf16 %v177, %v177
    %v186 = vld [vmem:[#allocation5] sm:$0xff]
    %v187 = vld [vmem:[#allocation5 + $0x8] sm:$0xff]
    %v188 = vld [vmem:[#allocation5 + $0x10] sm:$0xff]
    %v189 = vld [vmem:[#allocation5 + $0x18] sm:$0xff]
    %v190 = vld [vmem:[#allocation5 + $0x20] sm:$0xff]
    %v191 = vld [vmem:[#allocation5 + $0x28] sm:$0xff]
    %v192 = vld [vmem:[#allocation5 + $0x30] sm:$0xff]
    %v193 = vld [vmem:[#allocation5 + $0x38] sm:$0xff]
    %v194 = vld [vmem:[#allocation5 + $0x40] sm:$0xff]
    %v195 = vld [vmem:[#allocation5 + $0x48] sm:$0xff]
    %v196 = vld [vmem:[#allocation5 + $0x50] sm:$0xff]
    %v197 = vld [vmem:[#allocation5 + $0x58] sm:$0xff]
    %v198 = vld [vmem:[#allocation5 + $0x60] sm:$0xff]
    %v199 = vld [vmem:[#allocation5 + $0x68] sm:$0xff]
    %v200 = vld [vmem:[#allocation5 + $0x70] sm:$0xff]
    %v201 = vld [vmem:[#allocation5 + $0x78] sm:$0xff]
    %v202 = vld [vmem:[#allocation5 + $0x80] sm:$0xff]
    %v203 = vld [vmem:[#allocation5 + $0x88] sm:$0xff]
    %v204 = vld [vmem:[#allocation5 + $0x90] sm:$0xff]
    %v205 = vld [vmem:[#allocation5 + $0x98] sm:$0xff]
    %v206 = vld [vmem:[#allocation5 + $0xa0] sm:$0xff]
    %v207 = vld [vmem:[#allocation5 + $0xa8] sm:$0xff]
    %v208 = vld [vmem:[#allocation5 + $0xb0] sm:$0xff]
    %v209 = vld [vmem:[#allocation5 + $0xb8] sm:$0xff]
    %v210 = vld [vmem:[#allocation5 + $0xc0] sm:$0xff]
    %v211 = vld [vmem:[#allocation5 + $0xc8] sm:$0xff]
    %v212 = vld [vmem:[#allocation5 + $0xd0] sm:$0xff]
    %v213 = vld [vmem:[#allocation5 + $0xd8] sm:$0xff]
    %v214 = vld [vmem:[#allocation5 + $0xe0] sm:$0xff]
    %v215 = vld [vmem:[#allocation5 + $0xe8] sm:$0xff]
    %v216 = vld [vmem:[#allocation5 + $0xf0] sm:$0xff]
    %v217 = vld [vmem:[#allocation5 + $0xf8] sm:$0xff]
    %v218 = vld [vmem:[#allocation5 + $0x100] sm:$0xff]
    %v219 = vld [vmem:[#allocation5 + $0x108] sm:$0xff]
    %v220 = vld [vmem:[#allocation5 + $0x110] sm:$0xff]
    %v221 = vld [vmem:[#allocation5 + $0x118] sm:$0xff]
    %v222 = vld [vmem:[#allocation5 + $0x120] sm:$0xff]
    %v223 = vld [vmem:[#allocation5 + $0x128] sm:$0xff]
    %v224 = vld [vmem:[#allocation5 + $0x130] sm:$0xff]
    %v225 = vld [vmem:[#allocation5 + $0x138] sm:$0xff]
    %v226 = vld [vmem:[#allocation5 + $0x140] sm:$0xff]
    %v227 = vld [vmem:[#allocation5 + $0x148] sm:$0xff]
    %v228 = vld [vmem:[#allocation5 + $0x150] sm:$0xff]
    %v229 = vld [vmem:[#allocation5 + $0x158] sm:$0xff]
    %v230 = vld [vmem:[#allocation5 + $0x160] sm:$0xff]
    %v231 = vld [vmem:[#allocation5 + $0x168] sm:$0xff]
    %v232 = vld [vmem:[#allocation5 + $0x170] sm:$0xff]
    %v233 = vld [vmem:[#allocation5 + $0x178] sm:$0xff]
    %v234 = vld [vmem:[#allocation5 + $0x180] sm:$0xff]
    %v235 = vld [vmem:[#allocation5 + $0x188] sm:$0xff]
    %v236 = vld [vmem:[#allocation5 + $0x190] sm:$0xff]
    %v237 = vld [vmem:[#allocation5 + $0x198] sm:$0xff]
    %v238 = vld [vmem:[#allocation5 + $0x1a0] sm:$0xff]
    %v239 = vld [vmem:[#allocation5 + $0x1a8] sm:$0xff]
    %v240 = vld [vmem:[#allocation5 + $0x1b0] sm:$0xff]
    %v241 = vld [vmem:[#allocation5 + $0x1b8] sm:$0xff]
    %v242 = vld [vmem:[#allocation5 + $0x1c0] sm:$0xff]
    %v243 = vld [vmem:[#allocation5 + $0x1c8] sm:$0xff]
    %v244 = vld [vmem:[#allocation5 + $0x1d0] sm:$0xff]
    %v245 = vld [vmem:[#allocation5 + $0x1d8] sm:$0xff]
    %v246 = vld [vmem:[#allocation5 + $0x1e0] sm:$0xff]
    %v247 = vld [vmem:[#allocation5 + $0x1e8] sm:$0xff]
    %v248 = vld [vmem:[#allocation5 + $0x1f0] sm:$0xff]
    %v249 = vld [vmem:[#allocation5 + $0x1f8] sm:$0xff]
    %v250 = vld [vmem:[#allocation5 + $0x200] sm:$0xff]
    %v251 = vld [vmem:[#allocation5 + $0x208] sm:$0xff]
    %v252 = vld [vmem:[#allocation5 + $0x210] sm:$0xff]
    %v253 = vld [vmem:[#allocation5 + $0x218] sm:$0xff]
    %v254 = vld [vmem:[#allocation5 + $0x220] sm:$0xff]
    %v255 = vld [vmem:[#allocation5 + $0x228] sm:$0xff]
    %v256 = vld [vmem:[#allocation5 + $0x230] sm:$0xff]
    %v257 = vld [vmem:[#allocation5 + $0x238] sm:$0xff]
    %v258 = vld [vmem:[#allocation5 + $0x240] sm:$0xff]
    %v259 = vld [vmem:[#allocation5 + $0x248] sm:$0xff]
    %v260 = vld [vmem:[#allocation5 + $0x250] sm:$0xff]
    %v261 = vld [vmem:[#allocation5 + $0x258] sm:$0xff]
    %v262 = vld [vmem:[#allocation5 + $0x260] sm:$0xff]
    %v263 = vld [vmem:[#allocation5 + $0x268] sm:$0xff]
    %v264 = vld [vmem:[#allocation5 + $0x270] sm:$0xff]
    %v265 = vld [vmem:[#allocation5 + $0x278] sm:$0xff]
    %v266 = vld [vmem:[#allocation5 + $0x280] sm:$0xff]
    %v267 = vld [vmem:[#allocation5 + $0x288] sm:$0xff]
    %v268 = vld [vmem:[#allocation5 + $0x290] sm:$0xff]
    %v269 = vld [vmem:[#allocation5 + $0x298] sm:$0xff]
    %v270 = vld [vmem:[#allocation5 + $0x2a0] sm:$0xff]
    %v271 = vld [vmem:[#allocation5 + $0x2a8] sm:$0xff]
    %v272 = vld [vmem:[#allocation5 + $0x2b0] sm:$0xff]
    %v273 = vld [vmem:[#allocation5 + $0x2b8] sm:$0xff]
    %v274 = vld [vmem:[#allocation5 + $0x2c0] sm:$0xff]
    %v275 = vld [vmem:[#allocation5 + $0x2c8] sm:$0xff]
    %v276 = vld [vmem:[#allocation5 + $0x2d0] sm:$0xff]
    %v277 = vld [vmem:[#allocation5 + $0x2d8] sm:$0xff]
    %v278 = vld [vmem:[#allocation5 + $0x2e0] sm:$0xff]
    %v279 = vld [vmem:[#allocation5 + $0x2e8] sm:$0xff]
    %v280 = vld [vmem:[#allocation5 + $0x2f0] sm:$0xff]
    %v281 = vld [vmem:[#allocation5 + $0x2f8] sm:$0xff]
    %v282 = vld [vmem:[#allocation5 + $0x300] sm:$0xff]
    %v283 = vld [vmem:[#allocation5 + $0x308] sm:$0xff]
    %v284 = vld [vmem:[#allocation5 + $0x310] sm:$0xff]
    %v285 = vld [vmem:[#allocation5 + $0x318] sm:$0xff]
    %v286 = vld [vmem:[#allocation5 + $0x320] sm:$0xff]
    %v287 = vld [vmem:[#allocation5 + $0x328] sm:$0xff]
    %v288 = vld [vmem:[#allocation5 + $0x330] sm:$0xff]
    %v289 = vld [vmem:[#allocation5 + $0x338] sm:$0xff]
    %v290 = vld [vmem:[#allocation5 + $0x340] sm:$0xff]
    %v291 = vld [vmem:[#allocation5 + $0x348] sm:$0xff]
    %v292 = vld [vmem:[#allocation5 + $0x350] sm:$0xff]
    %v293 = vld [vmem:[#allocation5 + $0x358] sm:$0xff]
    %v294 = vld [vmem:[#allocation5 + $0x360] sm:$0xff]
    %v295 = vld [vmem:[#allocation5 + $0x368] sm:$0xff]
    %v296 = vld [vmem:[#allocation5 + $0x370] sm:$0xff]
    %v297 = vld [vmem:[#allocation5 + $0x378] sm:$0xff]
    %v298 = vld [vmem:[#allocation5 + $0x380] sm:$0xff]
    %v299 = vld [vmem:[#allocation5 + $0x388] sm:$0xff]
    %v300 = vld [vmem:[#allocation5 + $0x390] sm:$0xff]
    %v301 = vld [vmem:[#allocation5 + $0x398] sm:$0xff]
    %v302 = vld [vmem:[#allocation5 + $0x3a0] sm:$0xff]
    %v303 = vld [vmem:[#allocation5 + $0x3a8] sm:$0xff]
    %v304 = vld [vmem:[#allocation5 + $0x3b0] sm:$0xff]
    %v305 = vld [vmem:[#allocation5 + $0x3b8] sm:$0xff]
    %v306 = vld [vmem:[#allocation5 + $0x3c0] sm:$0xff]
    %v307 = vld [vmem:[#allocation5 + $0x3c8] sm:$0xff]
    %v308 = vld [vmem:[#allocation5 + $0x3d0] sm:$0xff]
    %v309 = vld [vmem:[#allocation5 + $0x3d8] sm:$0xff]
    %v310 = vld [vmem:[#allocation5 + $0x3e0] sm:$0xff]
    %v311 = vld [vmem:[#allocation5 + $0x3e8] sm:$0xff]
    %v312 = vld [vmem:[#allocation5 + $0x3f0] sm:$0xff]
    %v313 = vld [vmem:[#allocation5 + $0x3f8] sm:$0xff]
    %v314 = vld [vmem:[%s2] sm:$0xf]
    %v316 = vlaneseq
    %v317 = vshrl.u32 %v316, 7
    %v318 = vsub.s32 0, %v317
    %v319 = vrot.slane %v314, %v318
    %v320 = vlaneseq
    %v321 = vshrl.u32 %v320, 7
    %v322 = vsub.s32 1, %v321
    %v323 = vrot.slane %v314, %v322
    %v324 = vlaneseq
    %v325 = vshrl.u32 %v324, 7
    %v326 = vsub.s32 2, %v325
    %v327 = vrot.slane %v314, %v326
    %v328 = vlaneseq
    %v329 = vshrl.u32 %v328, 7
    %v330 = vsub.s32 3, %v329
    %v331 = vrot.slane %v314, %v330
    %v464 = vunpack.c.l.b16 %v186
    %v465 = vunpack.c.h.b16 %v186
    %v466 = vunpack.c.l.b16 %v187
    %v467 = vunpack.c.h.b16 %v187
    %v468 = vunpack.c.l.b16 %v188
    %v469 = vunpack.c.h.b16 %v188
    %v470 = vunpack.c.l.b16 %v189
    %v471 = vunpack.c.h.b16 %v189
    %v472 = vunpack.c.l.b16 %v190
    %v473 = vunpack.c.h.b16 %v190
    %v474 = vunpack.c.l.b16 %v191
    %v475 = vunpack.c.h.b16 %v191
    %v476 = vunpack.c.l.b16 %v192
    %v477 = vunpack.c.h.b16 %v192
    %v478 = vunpack.c.l.b16 %v193
    %v479 = vunpack.c.h.b16 %v193
    %v480 = vunpack.c.l.b16 %v194
    %v481 = vunpack.c.h.b16 %v194
    %v482 = vunpack.c.l.b16 %v195
    %v483 = vunpack.c.h.b16 %v195
    %v484 = vunpack.c.l.b16 %v196
    %v485 = vunpack.c.h.b16 %v196
    %v486 = vunpack.c.l.b16 %v197
    %v487 = vunpack.c.h.b16 %v197
    %v488 = vunpack.c.l.b16 %v198
    %v489 = vunpack.c.h.b16 %v198
    %v490 = vunpack.c.l.b16 %v199
    %v491 = vunpack.c.h.b16 %v199
    %v492 = vunpack.c.l.b16 %v200
    %v493 = vunpack.c.h.b16 %v200
    %v494 = vunpack.c.l.b16 %v201
    %v495 = vunpack.c.h.b16 %v201
    %v496 = vunpack.c.l.b16 %v202
    %v497 = vunpack.c.h.b16 %v202
    %v498 = vunpack.c.l.b16 %v203
    %v499 = vunpack.c.h.b16 %v203
    %v500 = vunpack.c.l.b16 %v204
    %v501 = vunpack.c.h.b16 %v204
    %v502 = vunpack.c.l.b16 %v205
    %v503 = vunpack.c.h.b16 %v205
    %v504 = vunpack.c.l.b16 %v206
    %v505 = vunpack.c.h.b16 %v206
    %v506 = vunpack.c.l.b16 %v207
    %v507 = vunpack.c.h.b16 %v207
    %v508 = vunpack.c.l.b16 %v208
    %v509 = vunpack.c.h.b16 %v208
    %v510 = vunpack.c.l.b16 %v209
    %v511 = vunpack.c.h.b16 %v209
    %v512 = vunpack.c.l.b16 %v210
    %v513 = vunpack.c.h.b16 %v210
    %v514 = vunpack.c.l.b16 %v211
    %v515 = vunpack.c.h.b16 %v211
    %v516 = vunpack.c.l.b16 %v212
    %v517 = vunpack.c.h.b16 %v212
    %v518 = vunpack.c.l.b16 %v213
    %v519 = vunpack.c.h.b16 %v213
    %v520 = vunpack.c.l.b16 %v214
    %v521 = vunpack.c.h.b16 %v214
    %v522 = vunpack.c.l.b16 %v215
    %v523 = vunpack.c.h.b16 %v215
    %v524 = vunpack.c.l.b16 %v216
    %v525 = vunpack.c.h.b16 %v216
    %v526 = vunpack.c.l.b16 %v217
    %v527 = vunpack.c.h.b16 %v217
    %v528 = vunpack.c.l.b16 %v218
    %v529 = vunpack.c.h.b16 %v218
    %v530 = vunpack.c.l.b16 %v219
    %v531 = vunpack.c.h.b16 %v219
    %v532 = vunpack.c.l.b16 %v220
    %v533 = vunpack.c.h.b16 %v220
    %v534 = vunpack.c.l.b16 %v221
    %v535 = vunpack.c.h.b16 %v221
    %v536 = vunpack.c.l.b16 %v222
    %v537 = vunpack.c.h.b16 %v222
    %v538 = vunpack.c.l.b16 %v223
    %v539 = vunpack.c.h.b16 %v223
    %v540 = vunpack.c.l.b16 %v224
    %v541 = vunpack.c.h.b16 %v224
    %v542 = vunpack.c.l.b16 %v225
    %v543 = vunpack.c.h.b16 %v225
    %v544 = vunpack.c.l.b16 %v226
    %v545 = vunpack.c.h.b16 %v226
    %v546 = vunpack.c.l.b16 %v227
    %v547 = vunpack.c.h.b16 %v227
    %v548 = vunpack.c.l.b16 %v228
    %v549 = vunpack.c.h.b16 %v228
    %v550 = vunpack.c.l.b16 %v229
    %v551 = vunpack.c.h.b16 %v229
    %v552 = vunpack.c.l.b16 %v230
    %v553 = vunpack.c.h.b16 %v230
    %v554 = vunpack.c.l.b16 %v231
    %v555 = vunpack.c.h.b16 %v231
    %v556 = vunpack.c.l.b16 %v232
    %v557 = vunpack.c.h.b16 %v232
    %v558 = vunpack.c.l.b16 %v233
    %v559 = vunpack.c.h.b16 %v233
    %v560 = vunpack.c.l.b16 %v234
    %v561 = vunpack.c.h.b16 %v234
    %v562 = vunpack.c.l.b16 %v235
    %v563 = vunpack.c.h.b16 %v235
    %v564 = vunpack.c.l.b16 %v236
    %v565 = vunpack.c.h.b16 %v236
    %v566 = vunpack.c.l.b16 %v237
    %v567 = vunpack.c.h.b16 %v237
    %v568 = vunpack.c.l.b16 %v238
    %v569 = vunpack.c.h.b16 %v238
    %v570 = vunpack.c.l.b16 %v239
    %v571 = vunpack.c.h.b16 %v239
    %v572 = vunpack.c.l.b16 %v240
    %v573 = vunpack.c.h.b16 %v240
    %v574 = vunpack.c.l.b16 %v241
    %v575 = vunpack.c.h.b16 %v241
    %v576 = vunpack.c.l.b16 %v242
    %v577 = vunpack.c.h.b16 %v242
    %v578 = vunpack.c.l.b16 %v243
    %v579 = vunpack.c.h.b16 %v243
    %v580 = vunpack.c.l.b16 %v244
    %v581 = vunpack.c.h.b16 %v244
    %v582 = vunpack.c.l.b16 %v245
    %v583 = vunpack.c.h.b16 %v245
    %v584 = vunpack.c.l.b16 %v246
    %v585 = vunpack.c.h.b16 %v246
    %v586 = vunpack.c.l.b16 %v247
    %v587 = vunpack.c.h.b16 %v247
    %v588 = vunpack.c.l.b16 %v248
    %v589 = vunpack.c.h.b16 %v248
    %v590 = vunpack.c.l.b16 %v249
    %v591 = vunpack.c.h.b16 %v249
    %v592 = vunpack.c.l.b16 %v250
    %v593 = vunpack.c.h.b16 %v250
    %v594 = vunpack.c.l.b16 %v251
    %v595 = vunpack.c.h.b16 %v251
    %v596 = vunpack.c.l.b16 %v252
    %v597 = vunpack.c.h.b16 %v252
    %v598 = vunpack.c.l.b16 %v253
    %v599 = vunpack.c.h.b16 %v253
    %v600 = vunpack.c.l.b16 %v254
    %v601 = vunpack.c.h.b16 %v254
    %v602 = vunpack.c.l.b16 %v255
    %v603 = vunpack.c.h.b16 %v255
    %v604 = vunpack.c.l.b16 %v256
    %v605 = vunpack.c.h.b16 %v256
    %v606 = vunpack.c.l.b16 %v257
    %v607 = vunpack.c.h.b16 %v257
    %v608 = vunpack.c.l.b16 %v258
    %v609 = vunpack.c.h.b16 %v258
    %v610 = vunpack.c.l.b16 %v259
    %v611 = vunpack.c.h.b16 %v259
    %v612 = vunpack.c.l.b16 %v260
    %v613 = vunpack.c.h.b16 %v260
    %v614 = vunpack.c.l.b16 %v261
    %v615 = vunpack.c.h.b16 %v261
    %v616 = vunpack.c.l.b16 %v262
    %v617 = vunpack.c.h.b16 %v262
    %v618 = vunpack.c.l.b16 %v263
    %v619 = vunpack.c.h.b16 %v263
    %v620 = vunpack.c.l.b16 %v264
    %v621 = vunpack.c.h.b16 %v264
    %v622 = vunpack.c.l.b16 %v265
    %v623 = vunpack.c.h.b16 %v265
    %v624 = vunpack.c.l.b16 %v266
    %v625 = vunpack.c.h.b16 %v266
    %v626 = vunpack.c.l.b16 %v267
    %v627 = vunpack.c.h.b16 %v267
    %v628 = vunpack.c.l.b16 %v268
    %v629 = vunpack.c.h.b16 %v268
    %v630 = vunpack.c.l.b16 %v269
    %v631 = vunpack.c.h.b16 %v269
    %v632 = vunpack.c.l.b16 %v270
    %v633 = vunpack.c.h.b16 %v270
    %v634 = vunpack.c.l.b16 %v271
    %v635 = vunpack.c.h.b16 %v271
    %v636 = vunpack.c.l.b16 %v272
    %v637 = vunpack.c.h.b16 %v272
    %v638 = vunpack.c.l.b16 %v273
    %v639 = vunpack.c.h.b16 %v273
    %v640 = vunpack.c.l.b16 %v274
    %v641 = vunpack.c.h.b16 %v274
    %v642 = vunpack.c.l.b16 %v275
    %v643 = vunpack.c.h.b16 %v275
    %v644 = vunpack.c.l.b16 %v276
    %v645 = vunpack.c.h.b16 %v276
    %v646 = vunpack.c.l.b16 %v277
    %v647 = vunpack.c.h.b16 %v277
    %v648 = vunpack.c.l.b16 %v278
    %v649 = vunpack.c.h.b16 %v278
    %v650 = vunpack.c.l.b16 %v279
    %v651 = vunpack.c.h.b16 %v279
    %v652 = vunpack.c.l.b16 %v280
    %v653 = vunpack.c.h.b16 %v280
    %v654 = vunpack.c.l.b16 %v281
    %v655 = vunpack.c.h.b16 %v281
    %v656 = vunpack.c.l.b16 %v282
    %v657 = vunpack.c.h.b16 %v282
    %v658 = vunpack.c.l.b16 %v283
    %v659 = vunpack.c.h.b16 %v283
    %v660 = vunpack.c.l.b16 %v284
    %v661 = vunpack.c.h.b16 %v284
    %v662 = vunpack.c.l.b16 %v285
    %v663 = vunpack.c.h.b16 %v285
    %v664 = vunpack.c.l.b16 %v286
    %v665 = vunpack.c.h.b16 %v286
    %v666 = vunpack.c.l.b16 %v287
    %v667 = vunpack.c.h.b16 %v287
    %v668 = vunpack.c.l.b16 %v288
    %v669 = vunpack.c.h.b16 %v288
    %v670 = vunpack.c.l.b16 %v289
    %v671 = vunpack.c.h.b16 %v289
    %v672 = vunpack.c.l.b16 %v290
    %v673 = vunpack.c.h.b16 %v290
    %v674 = vunpack.c.l.b16 %v291
    %v675 = vunpack.c.h.b16 %v291
    %v676 = vunpack.c.l.b16 %v292
    %v677 = vunpack.c.h.b16 %v292
    %v678 = vunpack.c.l.b16 %v293
    %v679 = vunpack.c.h.b16 %v293
    %v680 = vunpack.c.l.b16 %v294
    %v681 = vunpack.c.h.b16 %v294
    %v682 = vunpack.c.l.b16 %v295
    %v683 = vunpack.c.h.b16 %v295
    %v684 = vunpack.c.l.b16 %v296
    %v685 = vunpack.c.h.b16 %v296
    %v686 = vunpack.c.l.b16 %v297
    %v687 = vunpack.c.h.b16 %v297
    %v688 = vunpack.c.l.b16 %v298
    %v689 = vunpack.c.h.b16 %v298
    %v690 = vunpack.c.l.b16 %v299
    %v691 = vunpack.c.h.b16 %v299
    %v692 = vunpack.c.l.b16 %v300
    %v693 = vunpack.c.h.b16 %v300
    %v694 = vunpack.c.l.b16 %v301
    %v695 = vunpack.c.h.b16 %v301
    %v696 = vunpack.c.l.b16 %v302
    %v697 = vunpack.c.h.b16 %v302
    %v698 = vunpack.c.l.b16 %v303
    %v699 = vunpack.c.h.b16 %v303
    %v700 = vunpack.c.l.b16 %v304
    %v701 = vunpack.c.h.b16 %v304
    %v702 = vunpack.c.l.b16 %v305
    %v703 = vunpack.c.h.b16 %v305
    %v704 = vunpack.c.l.b16 %v306
    %v705 = vunpack.c.h.b16 %v306
    %v706 = vunpack.c.l.b16 %v307
    %v707 = vunpack.c.h.b16 %v307
    %v708 = vunpack.c.l.b16 %v308
    %v709 = vunpack.c.h.b16 %v308
    %v710 = vunpack.c.l.b16 %v309
    %v711 = vunpack.c.h.b16 %v309
    %v712 = vunpack.c.l.b16 %v310
    %v713 = vunpack.c.h.b16 %v310
    %v714 = vunpack.c.l.b16 %v311
    %v715 = vunpack.c.h.b16 %v311
    %v716 = vunpack.c.l.b16 %v312
    %v717 = vunpack.c.h.b16 %v312
    %v718 = vunpack.c.l.b16 %v313
    %v719 = vunpack.c.h.b16 %v313
    %v720 = vpack.c.b16 %v468, %v464
    %v721 = vpack.c.b16 %v469, %v465
    %v722 = vpack.c.b16 %v470, %v466
    %v723 = vpack.c.b16 %v471, %v467
    %v724 = vpack.c.b16 %v476, %v472
    %v725 = vpack.c.b16 %v477, %v473
    %v726 = vpack.c.b16 %v478, %v474
    %v727 = vpack.c.b16 %v479, %v475
    %v728 = vpack.c.b16 %v484, %v480
    %v729 = vpack.c.b16 %v485, %v481
    %v730 = vpack.c.b16 %v486, %v482
    %v731 = vpack.c.b16 %v487, %v483
    %v732 = vpack.c.b16 %v492, %v488
    %v733 = vpack.c.b16 %v493, %v489
    %v734 = vpack.c.b16 %v494, %v490
    %v735 = vpack.c.b16 %v495, %v491
    %v736 = vpack.c.b16 %v500, %v496
    %v737 = vpack.c.b16 %v501, %v497
    %v738 = vpack.c.b16 %v502, %v498
    %v739 = vpack.c.b16 %v503, %v499
    %v740 = vpack.c.b16 %v508, %v504
    %v741 = vpack.c.b16 %v509, %v505
    %v742 = vpack.c.b16 %v510, %v506
    %v743 = vpack.c.b16 %v511, %v507
    %v744 = vpack.c.b16 %v516, %v512
    %v745 = vpack.c.b16 %v517, %v513
    %v746 = vpack.c.b16 %v518, %v514
    %v747 = vpack.c.b16 %v519, %v515
    %v748 = vpack.c.b16 %v524, %v520
    %v749 = vpack.c.b16 %v525, %v521
    %v750 = vpack.c.b16 %v526, %v522
    %v751 = vpack.c.b16 %v527, %v523
    %v752 = vpack.c.b16 %v532, %v528
    %v753 = vpack.c.b16 %v533, %v529
    %v754 = vpack.c.b16 %v534, %v530
    %v755 = vpack.c.b16 %v535, %v531
    %v756 = vpack.c.b16 %v540, %v536
    %v757 = vpack.c.b16 %v541, %v537
    %v758 = vpack.c.b16 %v542, %v538
    %v759 = vpack.c.b16 %v543, %v539
    %v760 = vpack.c.b16 %v548, %v544
    %v761 = vpack.c.b16 %v549, %v545
    %v762 = vpack.c.b16 %v550, %v546
    %v763 = vpack.c.b16 %v551, %v547
    %v764 = vpack.c.b16 %v556, %v552
    %v765 = vpack.c.b16 %v557, %v553
    %v766 = vpack.c.b16 %v558, %v554
    %v767 = vpack.c.b16 %v559, %v555
    %v768 = vpack.c.b16 %v564, %v560
    %v769 = vpack.c.b16 %v565, %v561
    %v770 = vpack.c.b16 %v566, %v562
    %v771 = vpack.c.b16 %v567, %v563
    %v772 = vpack.c.b16 %v572, %v568
    %v773 = vpack.c.b16 %v573, %v569
    %v774 = vpack.c.b16 %v574, %v570
    %v775 = vpack.c.b16 %v575, %v571
    %v776 = vpack.c.b16 %v580, %v576
    %v777 = vpack.c.b16 %v581, %v577
    %v778 = vpack.c.b16 %v582, %v578
    %v779 = vpack.c.b16 %v583, %v579
    %v780 = vpack.c.b16 %v588, %v584
    %v781 = vpack.c.b16 %v589, %v585
    %v782 = vpack.c.b16 %v590, %v586
    %v783 = vpack.c.b16 %v591, %v587
    %v784 = vpack.c.b16 %v596, %v592
    %v785 = vpack.c.b16 %v597, %v593
    %v786 = vpack.c.b16 %v598, %v594
    %v787 = vpack.c.b16 %v599, %v595
    %v788 = vpack.c.b16 %v604, %v600
    %v789 = vpack.c.b16 %v605, %v601
    %v790 = vpack.c.b16 %v606, %v602
    %v791 = vpack.c.b16 %v607, %v603
    %v792 = vpack.c.b16 %v612, %v608
    %v793 = vpack.c.b16 %v613, %v609
    %v794 = vpack.c.b16 %v614, %v610
    %v795 = vpack.c.b16 %v615, %v611
    %v796 = vpack.c.b16 %v620, %v616
    %v797 = vpack.c.b16 %v621, %v617
    %v798 = vpack.c.b16 %v622, %v618
    %v799 = vpack.c.b16 %v623, %v619
    %v800 = vpack.c.b16 %v628, %v624
    %v801 = vpack.c.b16 %v629, %v625
    %v802 = vpack.c.b16 %v630, %v626
    %v803 = vpack.c.b16 %v631, %v627
    %v804 = vpack.c.b16 %v636, %v632
    %v805 = vpack.c.b16 %v637, %v633
    %v806 = vpack.c.b16 %v638, %v634
    %v807 = vpack.c.b16 %v639, %v635
    %v808 = vpack.c.b16 %v644, %v640
    %v809 = vpack.c.b16 %v645, %v641
    %v810 = vpack.c.b16 %v646, %v642
    %v811 = vpack.c.b16 %v647, %v643
    %v812 = vpack.c.b16 %v652, %v648
    %v813 = vpack.c.b16 %v653, %v649
    %v814 = vpack.c.b16 %v654, %v650
    %v815 = vpack.c.b16 %v655, %v651
    %v816 = vpack.c.b16 %v660, %v656
    %v817 = vpack.c.b16 %v661, %v657
    %v818 = vpack.c.b16 %v662, %v658
    %v819 = vpack.c.b16 %v663, %v659
    %v820 = vpack.c.b16 %v668, %v664
    %v821 = vpack.c.b16 %v669, %v665
    %v822 = vpack.c.b16 %v670, %v666
    %v823 = vpack.c.b16 %v671, %v667
    %v824 = vpack.c.b16 %v676, %v672
    %v825 = vpack.c.b16 %v677, %v673
    %v826 = vpack.c.b16 %v678, %v674
    %v827 = vpack.c.b16 %v679, %v675
    %v828 = vpack.c.b16 %v684, %v680
    %v829 = vpack.c.b16 %v685, %v681
    %v830 = vpack.c.b16 %v686, %v682
    %v831 = vpack.c.b16 %v687, %v683
    %v832 = vpack.c.b16 %v692, %v688
    %v833 = vpack.c.b16 %v693, %v689
    %v834 = vpack.c.b16 %v694, %v690
    %v835 = vpack.c.b16 %v695, %v691
    %v836 = vpack.c.b16 %v700, %v696
    %v837 = vpack.c.b16 %v701, %v697
    %v838 = vpack.c.b16 %v702, %v698
    %v839 = vpack.c.b16 %v703, %v699
    %v840 = vpack.c.b16 %v708, %v704
    %v841 = vpack.c.b16 %v709, %v705
    %v842 = vpack.c.b16 %v710, %v706
    %v843 = vpack.c.b16 %v711, %v707
    %v844 = vpack.c.b16 %v716, %v712
    %v845 = vpack.c.b16 %v717, %v713
    %v846 = vpack.c.b16 %v718, %v714
    %v847 = vpack.c.b16 %v719, %v715
    %976 = vmatprep.subr.bf16.mxu0 %v721
    %977 = vmatpush1.bf16.msra.mxu0 %v720
    %978 = vmatprep.subr.bf16.mxu0 %v725
    %979 = vmatpush1.bf16.msra.mxu0 %v724
    %980 = vmatprep.subr.bf16.mxu0 %v729
    %981 = vmatpush1.bf16.msra.mxu0 %v728
    %982 = vmatprep.subr.bf16.mxu0 %v733
    %983 = vmatpush1.bf16.msra.mxu0 %v732
    %984 = vmatprep.subr.bf16.mxu0 %v737
    %985 = vmatpush1.bf16.msra.mxu0 %v736
    %986 = vmatprep.subr.bf16.mxu0 %v741
    %987 = vmatpush1.bf16.msra.mxu0 %v740
    %988 = vmatprep.subr.bf16.mxu0 %v745
    %989 = vmatpush1.bf16.msra.mxu0 %v744
    %990 = vmatprep.subr.bf16.mxu0 %v749
    %991 = vmatpush1.bf16.msra.mxu0 %v748
    %992 = vmatprep.subr.bf16.mxu0 %v753
    %993 = vmatpush1.bf16.msra.mxu0 %v752
    %994 = vmatprep.subr.bf16.mxu0 %v757
    %995 = vmatpush1.bf16.msra.mxu0 %v756
    %996 = vmatprep.subr.bf16.mxu0 %v761
    %997 = vmatpush1.bf16.msra.mxu0 %v760
    %998 = vmatprep.subr.bf16.mxu0 %v765
    %999 = vmatpush1.bf16.msra.mxu0 %v764
    %1000 = vmatprep.subr.bf16.mxu0 %v769
    %1001 = vmatpush1.bf16.msra.mxu0 %v768
    %1002 = vmatprep.subr.bf16.mxu0 %v773
    %1003 = vmatpush1.bf16.msra.mxu0 %v772
    %1004 = vmatprep.subr.bf16.mxu0 %v777
    %1005 = vmatpush1.bf16.msra.mxu0 %v776
    %1006 = vmatprep.subr.bf16.mxu0 %v781
    %1007 = vmatpush1.bf16.msra.mxu0 %v780
    %1008 = vmatprep.mubr.bf16.mxu0 %v183
    %1009 = vmatmul.mubr.bf16.gmra.mrb[0].mxu0 %v182
    %v1010 = vpop.f32.mrb[0].mxu0
    %v1011 = vadd.f32 %v319, %v1010
    %v1012 = vpop.f32.mrb[0].mxu0
    %v1013 = vadd.f32 %v323, %v1012
    %v1014 = vpop.f32.mrb[0].mxu0
    %v1015 = vpop.f32.mrb[0].mxu0
    %1016 = vdwg.mxu0
    %1017 = vmatprep.subr.bf16.mxu0 %v785
    %1018 = vmatpush1.bf16.msra.mxu0 %v784
    %1019 = vmatprep.subr.bf16.mxu0 %v789
    %1020 = vmatpush1.bf16.msra.mxu0 %v788
    %1021 = vmatprep.subr.bf16.mxu0 %v793
    %1022 = vmatpush1.bf16.msra.mxu0 %v792
    %1023 = vmatprep.subr.bf16.mxu0 %v797
    %1024 = vmatpush1.bf16.msra.mxu0 %v796
    %1025 = vmatprep.subr.bf16.mxu0 %v801
    %1026 = vmatpush1.bf16.msra.mxu0 %v800
    %1027 = vmatprep.subr.bf16.mxu0 %v805
    %1028 = vmatpush1.bf16.msra.mxu0 %v804
    %1029 = vmatprep.subr.bf16.mxu0 %v809
    %1030 = vmatpush1.bf16.msra.mxu0 %v808
    %1031 = vmatprep.subr.bf16.mxu0 %v813
    %1032 = vmatpush1.bf16.msra.mxu0 %v812
    %1033 = vmatprep.subr.bf16.mxu0 %v817
    %1034 = vmatpush1.bf16.msra.mxu0 %v816
    %1035 = vmatprep.subr.bf16.mxu0 %v821
    %1036 = vmatpush1.bf16.msra.mxu0 %v820
    %1037 = vmatprep.subr.bf16.mxu0 %v825
    %1038 = vmatpush1.bf16.msra.mxu0 %v824
    %1039 = vmatprep.subr.bf16.mxu0 %v829
    %1040 = vmatpush1.bf16.msra.mxu0 %v828
    %1041 = vmatprep.subr.bf16.mxu0 %v833
    %1042 = vmatpush1.bf16.msra.mxu0 %v832
    %1043 = vmatprep.subr.bf16.mxu0 %v837
    %1044 = vmatpush1.bf16.msra.mxu0 %v836
    %1045 = vmatprep.subr.bf16.mxu0 %v841
    %1046 = vmatpush1.bf16.msra.mxu0 %v840
    %1047 = vmatprep.subr.bf16.mxu0 %v845
    %1048 = vmatpush1.bf16.msra.mxu0 %v844
    %1049 = vmatprep.mubr.bf16.mxu0 %v185
    %1050 = vmatmul.mubr.bf16.gmra.mrb[0].mxu0 %v184
    %v1051 = vpop.f32.mrb[0].mxu0
    %v1052 = vadd.f32 %v1011, %v1051
    %v1053 = vpop.f32.mrb[0].mxu0
    %v1054 = vadd.f32 %v1013, %v1053
    %v1055 = vpop.f32.mrb[0].mxu0
    %v1056 = vpop.f32.mrb[0].mxu0
    %1057 = vdwg.mxu0
    %1058 = vmatprep.subr.bf16.mxu0 %v723
    %1059 = vmatpush1.bf16.msra.mxu0 %v722
    %1060 = vmatprep.subr.bf16.mxu0 %v727
    %1061 = vmatpush1.bf16.msra.mxu0 %v726
    %1062 = vmatprep.subr.bf16.mxu0 %v731
    %1063 = vmatpush1.bf16.msra.mxu0 %v730
    %1064 = vmatprep.subr.bf16.mxu0 %v735
    %1065 = vmatpush1.bf16.msra.mxu0 %v734
    %1066 = vmatprep.subr.bf16.mxu0 %v739
    %1067 = vmatpush1.bf16.msra.mxu0 %v738
    %1068 = vmatprep.subr.bf16.mxu0 %v743
    %1069 = vmatpush1.bf16.msra.mxu0 %v742
    %1070 = vmatprep.subr.bf16.mxu0 %v747
    %1071 = vmatpush1.bf16.msra.mxu0 %v746
    %1072 = vmatprep.subr.bf16.mxu0 %v751
    %1073 = vmatpush1.bf16.msra.mxu0 %v750
    %1074 = vmatprep.subr.bf16.mxu0 %v755
    %1075 = vmatpush1.bf16.msra.mxu0 %v754
    %1076 = vmatprep.subr.bf16.mxu0 %v759
    %1077 = vmatpush1.bf16.msra.mxu0 %v758
    %1078 = vmatprep.subr.bf16.mxu0 %v763
    %1079 = vmatpush1.bf16.msra.mxu0 %v762
    %1080 = vmatprep.subr.bf16.mxu0 %v767
    %1081 = vmatpush1.bf16.msra.mxu0 %v766
    %1082 = vmatprep.subr.bf16.mxu0 %v771
    %1083 = vmatpush1.bf16.msra.mxu0 %v770
    %1084 = vmatprep.subr.bf16.mxu0 %v775
    %1085 = vmatpush1.bf16.msra.mxu0 %v774
    %1086 = vmatprep.subr.bf16.mxu0 %v779
    %1087 = vmatpush1.bf16.msra.mxu0 %v778
    %1088 = vmatprep.subr.bf16.mxu0 %v783
    %1089 = vmatpush1.bf16.msra.mxu0 %v782
    %1090 = vmatprep.mubr.bf16.mxu0 %v183
    %1091 = vmatmul.mubr.bf16.gmra.mrb[0].mxu0 %v182
    %v1092 = vpop.f32.mrb[0].mxu0
    %v1093 = vadd.f32 %v327, %v1092
    %v1094 = vpop.f32.mrb[0].mxu0
    %v1095 = vadd.f32 %v331, %v1094
    %v1096 = vpop.f32.mrb[0].mxu0
    %v1097 = vpop.f32.mrb[0].mxu0
    %1098 = vdwg.mxu0
    %1099 = vmatprep.subr.bf16.mxu0 %v787
    %1100 = vmatpush1.bf16.msra.mxu0 %v786
    %1101 = vmatprep.subr.bf16.mxu0 %v791
    %1102 = vmatpush1.bf16.msra.mxu0 %v790
    %1103 = vmatprep.subr.bf16.mxu0 %v795
    %1104 = vmatpush1.bf16.msra.mxu0 %v794
    %1105 = vmatprep.subr.bf16.mxu0 %v799
    %1106 = vmatpush1.bf16.msra.mxu0 %v798
    %1107 = vmatprep.subr.bf16.mxu0 %v803
    %1108 = vmatpush1.bf16.msra.mxu0 %v802
    %1109 = vmatprep.subr.bf16.mxu0 %v807
    %1110 = vmatpush1.bf16.msra.mxu0 %v806
    %1111 = vmatprep.subr.bf16.mxu0 %v811
    %1112 = vmatpush1.bf16.msra.mxu0 %v810
    %1113 = vmatprep.subr.bf16.mxu0 %v815
    %1114 = vmatpush1.bf16.msra.mxu0 %v814
    %1115 = vmatprep.subr.bf16.mxu0 %v819
    %1116 = vmatpush1.bf16.msra.mxu0 %v818
    %1117 = vmatprep.subr.bf16.mxu0 %v823
    %1118 = vmatpush1.bf16.msra.mxu0 %v822
    %1119 = vmatprep.subr.bf16.mxu0 %v827
    %1120 = vmatpush1.bf16.msra.mxu0 %v826
    %1121 = vmatprep.subr.bf16.mxu0 %v831
    %1122 = vmatpush1.bf16.msra.mxu0 %v830
    %1123 = vmatprep.subr.bf16.mxu0 %v835
    %1124 = vmatpush1.bf16.msra.mxu0 %v834
    %1125 = vmatprep.subr.bf16.mxu0 %v839
    %1126 = vmatpush1.bf16.msra.mxu0 %v838
    %1127 = vmatprep.subr.bf16.mxu0 %v843
    %1128 = vmatpush1.bf16.msra.mxu0 %v842
    %1129 = vmatprep.subr.bf16.mxu0 %v847
    %1130 = vmatpush1.bf16.msra.mxu0 %v846
    %1131 = vmatprep.mubr.bf16.mxu0 %v185
    %1132 = vmatmul.mubr.bf16.gmra.mrb[0].mxu0 %v184
    %v1133 = vpop.f32.mrb[0].mxu0
    %v1134 = vadd.f32 %v1093, %v1133
    %v1135 = vpop.f32.mrb[0].mxu0
    %v1136 = vadd.f32 %v1095, %v1135
    %v1137 = vpop.f32.mrb[0].mxu0
    %v1138 = vpop.f32.mrb[0].mxu0
    %1139 = vdwg.mxu0
    %v1140 = vmax.f32 %v1052, 0.0
    %v1141 = vmax.f32 %v1054, 0.0
    %v1142 = vmax.f32 %v1134, 0.0
    %v1143 = vmax.f32 %v1136, 0.0
    %v1144 = vpack.c.bf16 %v1140, %v1140
    %v1145 = vpack.c.bf16 %v1141, %v1141
    %v1146 = vpack.c.bf16 %v1142, %v1142
    %v1147 = vpack.c.bf16 %v1143, %v1143
    %v1148 = vld [vmem:[#allocation7] sm:$0xff]
    %v1149 = vld [vmem:[#allocation7 + $0x8] sm:$0xff]
    %v1150 = vld [vmem:[#allocation7 + $0x10] sm:$0xff]
    %v1151 = vld [vmem:[#allocation7 + $0x18] sm:$0xff]
    %v1152 = vld [vmem:[#allocation7 + $0x20] sm:$0xff]
    %v1153 = vld [vmem:[#allocation7 + $0x28] sm:$0xff]
    %v1154 = vld [vmem:[#allocation7 + $0x30] sm:$0xff]
    %v1155 = vld [vmem:[#allocation7 + $0x38] sm:$0xff]
    %v1156 = vld [vmem:[#allocation7 + $0x40] sm:$0xff]
    %v1157 = vld [vmem:[#allocation7 + $0x48] sm:$0xff]
    %v1158 = vld [vmem:[#allocation7 + $0x50] sm:$0xff]
    %v1159 = vld [vmem:[#allocation7 + $0x58] sm:$0xff]
    %v1160 = vld [vmem:[#allocation7 + $0x60] sm:$0xff]
    %v1161 = vld [vmem:[#allocation7 + $0x68] sm:$0xff]
    %v1162 = vld [vmem:[#allocation7 + $0x70] sm:$0xff]
    %v1163 = vld [vmem:[#allocation7 + $0x78] sm:$0xff]
    %v1164 = vld [vmem:[#allocation7 + $0x80] sm:$0xff]
    %v1165 = vld [vmem:[#allocation7 + $0x88] sm:$0xff]
    %v1166 = vld [vmem:[#allocation7 + $0x90] sm:$0xff]
    %v1167 = vld [vmem:[#allocation7 + $0x98] sm:$0xff]
    %v1168 = vld [vmem:[#allocation7 + $0xa0] sm:$0xff]
    %v1169 = vld [vmem:[#allocation7 + $0xa8] sm:$0xff]
    %v1170 = vld [vmem:[#allocation7 + $0xb0] sm:$0xff]
    %v1171 = vld [vmem:[#allocation7 + $0xb8] sm:$0xff]
    %v1172 = vld [vmem:[#allocation7 + $0xc0] sm:$0xff]
    %v1173 = vld [vmem:[#allocation7 + $0xc8] sm:$0xff]
    %v1174 = vld [vmem:[#allocation7 + $0xd0] sm:$0xff]
    %v1175 = vld [vmem:[#allocation7 + $0xd8] sm:$0xff]
    %v1176 = vld [vmem:[#allocation7 + $0xe0] sm:$0xff]
    %v1177 = vld [vmem:[#allocation7 + $0xe8] sm:$0xff]
    %v1178 = vld [vmem:[#allocation7 + $0xf0] sm:$0xff]
    %v1179 = vld [vmem:[#allocation7 + $0xf8] sm:$0xff]
    %v1180 = vld [vmem:[#allocation7 + $0x100] sm:$0xff]
    %v1181 = vld [vmem:[#allocation7 + $0x108] sm:$0xff]
    %v1182 = vld [vmem:[#allocation7 + $0x110] sm:$0xff]
    %v1183 = vld [vmem:[#allocation7 + $0x118] sm:$0xff]
    %v1184 = vld [vmem:[#allocation7 + $0x120] sm:$0xff]
    %v1185 = vld [vmem:[#allocation7 + $0x128] sm:$0xff]
    %v1186 = vld [vmem:[#allocation7 + $0x130] sm:$0xff]
    %v1187 = vld [vmem:[#allocation7 + $0x138] sm:$0xff]
    %v1188 = vld [vmem:[#allocation7 + $0x140] sm:$0xff]
    %v1189 = vld [vmem:[#allocation7 + $0x148] sm:$0xff]
    %v1190 = vld [vmem:[#allocation7 + $0x150] sm:$0xff]
    %v1191 = vld [vmem:[#allocation7 + $0x158] sm:$0xff]
    %v1192 = vld [vmem:[#allocation7 + $0x160] sm:$0xff]
    %v1193 = vld [vmem:[#allocation7 + $0x168] sm:$0xff]
    %v1194 = vld [vmem:[#allocation7 + $0x170] sm:$0xff]
    %v1195 = vld [vmem:[#allocation7 + $0x178] sm:$0xff]
    %v1196 = vld [vmem:[#allocation7 + $0x180] sm:$0xff]
    %v1197 = vld [vmem:[#allocation7 + $0x188] sm:$0xff]
    %v1198 = vld [vmem:[#allocation7 + $0x190] sm:$0xff]
    %v1199 = vld [vmem:[#allocation7 + $0x198] sm:$0xff]
    %v1200 = vld [vmem:[#allocation7 + $0x1a0] sm:$0xff]
    %v1201 = vld [vmem:[#allocation7 + $0x1a8] sm:$0xff]
    %v1202 = vld [vmem:[#allocation7 + $0x1b0] sm:$0xff]
    %v1203 = vld [vmem:[#allocation7 + $0x1b8] sm:$0xff]
    %v1204 = vld [vmem:[#allocation7 + $0x1c0] sm:$0xff]
    %v1205 = vld [vmem:[#allocation7 + $0x1c8] sm:$0xff]
    %v1206 = vld [vmem:[#allocation7 + $0x1d0] sm:$0xff]
    %v1207 = vld [vmem:[#allocation7 + $0x1d8] sm:$0xff]
    %v1208 = vld [vmem:[#allocation7 + $0x1e0] sm:$0xff]
    %v1209 = vld [vmem:[#allocation7 + $0x1e8] sm:$0xff]
    %v1210 = vld [vmem:[#allocation7 + $0x1f0] sm:$0xff]
    %v1211 = vld [vmem:[#allocation7 + $0x1f8] sm:$0xff]
    %v1212 = vld [vmem:[%s4] sm:$0x3]
    %v1214 = vlaneseq
    %v1215 = vshrl.u32 %v1214, 7
    %v1216 = vsub.s32 0, %v1215
    %v1217 = vrot.slane %v1212, %v1216
    %v1218 = vlaneseq
    %v1219 = vshrl.u32 %v1218, 7
    %v1220 = vsub.s32 1, %v1219
    %v1221 = vrot.slane %v1212, %v1220
    %v1288 = vunpack.c.l.b16 %v1148
    %v1289 = vunpack.c.h.b16 %v1148
    %v1290 = vunpack.c.l.b16 %v1149
    %v1291 = vunpack.c.h.b16 %v1149
    %v1292 = vunpack.c.l.b16 %v1150
    %v1293 = vunpack.c.h.b16 %v1150
    %v1294 = vunpack.c.l.b16 %v1151
    %v1295 = vunpack.c.h.b16 %v1151
    %v1296 = vunpack.c.l.b16 %v1152
    %v1297 = vunpack.c.h.b16 %v1152
    %v1298 = vunpack.c.l.b16 %v1153
    %v1299 = vunpack.c.h.b16 %v1153
    %v1300 = vunpack.c.l.b16 %v1154
    %v1301 = vunpack.c.h.b16 %v1154
    %v1302 = vunpack.c.l.b16 %v1155
    %v1303 = vunpack.c.h.b16 %v1155
    %v1304 = vunpack.c.l.b16 %v1156
    %v1305 = vunpack.c.h.b16 %v1156
    %v1306 = vunpack.c.l.b16 %v1157
    %v1307 = vunpack.c.h.b16 %v1157
    %v1308 = vunpack.c.l.b16 %v1158
    %v1309 = vunpack.c.h.b16 %v1158
    %v1310 = vunpack.c.l.b16 %v1159
    %v1311 = vunpack.c.h.b16 %v1159
    %v1312 = vunpack.c.l.b16 %v1160
    %v1313 = vunpack.c.h.b16 %v1160
    %v1314 = vunpack.c.l.b16 %v1161
    %v1315 = vunpack.c.h.b16 %v1161
    %v1316 = vunpack.c.l.b16 %v1162
    %v1317 = vunpack.c.h.b16 %v1162
    %v1318 = vunpack.c.l.b16 %v1163
    %v1319 = vunpack.c.h.b16 %v1163
    %v1320 = vunpack.c.l.b16 %v1164
    %v1321 = vunpack.c.h.b16 %v1164
    %v1322 = vunpack.c.l.b16 %v1165
    %v1323 = vunpack.c.h.b16 %v1165
    %v1324 = vunpack.c.l.b16 %v1166
    %v1325 = vunpack.c.h.b16 %v1166
    %v1326 = vunpack.c.l.b16 %v1167
    %v1327 = vunpack.c.h.b16 %v1167
    %v1328 = vunpack.c.l.b16 %v1168
    %v1329 = vunpack.c.h.b16 %v1168
    %v1330 = vunpack.c.l.b16 %v1169
    %v1331 = vunpack.c.h.b16 %v1169
    %v1332 = vunpack.c.l.b16 %v1170
    %v1333 = vunpack.c.h.b16 %v1170
    %v1334 = vunpack.c.l.b16 %v1171
    %v1335 = vunpack.c.h.b16 %v1171
    %v1336 = vunpack.c.l.b16 %v1172
    %v1337 = vunpack.c.h.b16 %v1172
    %v1338 = vunpack.c.l.b16 %v1173
    %v1339 = vunpack.c.h.b16 %v1173
    %v1340 = vunpack.c.l.b16 %v1174
    %v1341 = vunpack.c.h.b16 %v1174
    %v1342 = vunpack.c.l.b16 %v1175
    %v1343 = vunpack.c.h.b16 %v1175
    %v1344 = vunpack.c.l.b16 %v1176
    %v1345 = vunpack.c.h.b16 %v1176
    %v1346 = vunpack.c.l.b16 %v1177
    %v1347 = vunpack.c.h.b16 %v1177
    %v1348 = vunpack.c.l.b16 %v1178
    %v1349 = vunpack.c.h.b16 %v1178
    %v1350 = vunpack.c.l.b16 %v1179
    %v1351 = vunpack.c.h.b16 %v1179
    %v1352 = vunpack.c.l.b16 %v1180
    %v1353 = vunpack.c.h.b16 %v1180
    %v1354 = vunpack.c.l.b16 %v1181
    %v1355 = vunpack.c.h.b16 %v1181
    %v1356 = vunpack.c.l.b16 %v1182
    %v1357 = vunpack.c.h.b16 %v1182
    %v1358 = vunpack.c.l.b16 %v1183
    %v1359 = vunpack.c.h.b16 %v1183
    %v1360 = vunpack.c.l.b16 %v1184
    %v1361 = vunpack.c.h.b16 %v1184
    %v1362 = vunpack.c.l.b16 %v1185
    %v1363 = vunpack.c.h.b16 %v1185
    %v1364 = vunpack.c.l.b16 %v1186
    %v1365 = vunpack.c.h.b16 %v1186
    %v1366 = vunpack.c.l.b16 %v1187
    %v1367 = vunpack.c.h.b16 %v1187
    %v1368 = vunpack.c.l.b16 %v1188
    %v1369 = vunpack.c.h.b16 %v1188
    %v1370 = vunpack.c.l.b16 %v1189
    %v1371 = vunpack.c.h.b16 %v1189
    %v1372 = vunpack.c.l.b16 %v1190
    %v1373 = vunpack.c.h.b16 %v1190
    %v1374 = vunpack.c.l.b16 %v1191
    %v1375 = vunpack.c.h.b16 %v1191
    %v1376 = vunpack.c.l.b16 %v1192
    %v1377 = vunpack.c.h.b16 %v1192
    %v1378 = vunpack.c.l.b16 %v1193
    %v1379 = vunpack.c.h.b16 %v1193
    %v1380 = vunpack.c.l.b16 %v1194
    %v1381 = vunpack.c.h.b16 %v1194
    %v1382 = vunpack.c.l.b16 %v1195
    %v1383 = vunpack.c.h.b16 %v1195
    %v1384 = vunpack.c.l.b16 %v1196
    %v1385 = vunpack.c.h.b16 %v1196
    %v1386 = vunpack.c.l.b16 %v1197
    %v1387 = vunpack.c.h.b16 %v1197
    %v1388 = vunpack.c.l.b16 %v1198
    %v1389 = vunpack.c.h.b16 %v1198
    %v1390 = vunpack.c.l.b16 %v1199
    %v1391 = vunpack.c.h.b16 %v1199
    %v1392 = vunpack.c.l.b16 %v1200
    %v1393 = vunpack.c.h.b16 %v1200
    %v1394 = vunpack.c.l.b16 %v1201
    %v1395 = vunpack.c.h.b16 %v1201
    %v1396 = vunpack.c.l.b16 %v1202
    %v1397 = vunpack.c.h.b16 %v1202
    %v1398 = vunpack.c.l.b16 %v1203
    %v1399 = vunpack.c.h.b16 %v1203
    %v1400 = vunpack.c.l.b16 %v1204
    %v1401 = vunpack.c.h.b16 %v1204
    %v1402 = vunpack.c.l.b16 %v1205
    %v1403 = vunpack.c.h.b16 %v1205
    %v1404 = vunpack.c.l.b16 %v1206
    %v1405 = vunpack.c.h.b16 %v1206
    %v1406 = vunpack.c.l.b16 %v1207
    %v1407 = vunpack.c.h.b16 %v1207
    %v1408 = vunpack.c.l.b16 %v1208
    %v1409 = vunpack.c.h.b16 %v1208
    %v1410 = vunpack.c.l.b16 %v1209
    %v1411 = vunpack.c.h.b16 %v1209
    %v1412 = vunpack.c.l.b16 %v1210
    %v1413 = vunpack.c.h.b16 %v1210
    %v1414 = vunpack.c.l.b16 %v1211
    %v1415 = vunpack.c.h.b16 %v1211
    %v1416 = vpack.c.b16 %v1290, %v1288
    %v1417 = vpack.c.b16 %v1291, %v1289
    %v1418 = vpack.c.b16 %v1294, %v1292
    %v1419 = vpack.c.b16 %v1295, %v1293
    %v1420 = vpack.c.b16 %v1298, %v1296
    %v1421 = vpack.c.b16 %v1299, %v1297
    %v1422 = vpack.c.b16 %v1302, %v1300
    %v1423 = vpack.c.b16 %v1303, %v1301
    %v1424 = vpack.c.b16 %v1306, %v1304
    %v1425 = vpack.c.b16 %v1307, %v1305
    %v1426 = vpack.c.b16 %v1310, %v1308
    %v1427 = vpack.c.b16 %v1311, %v1309
    %v1428 = vpack.c.b16 %v1314, %v1312
    %v1429 = vpack.c.b16 %v1315, %v1313
    %v1430 = vpack.c.b16 %v1318, %v1316
    %v1431 = vpack.c.b16 %v1319, %v1317
    %v1432 = vpack.c.b16 %v1322, %v1320
    %v1433 = vpack.c.b16 %v1323, %v1321
    %v1434 = vpack.c.b16 %v1326, %v1324
    %v1435 = vpack.c.b16 %v1327, %v1325
    %v1436 = vpack.c.b16 %v1330, %v1328
    %v1437 = vpack.c.b16 %v1331, %v1329
    %v1438 = vpack.c.b16 %v1334, %v1332
    %v1439 = vpack.c.b16 %v1335, %v1333
    %v1440 = vpack.c.b16 %v1338, %v1336
    %v1441 = vpack.c.b16 %v1339, %v1337
    %v1442 = vpack.c.b16 %v1342, %v1340
    %v1443 = vpack.c.b16 %v1343, %v1341
    %v1444 = vpack.c.b16 %v1346, %v1344
    %v1445 = vpack.c.b16 %v1347, %v1345
    %v1446 = vpack.c.b16 %v1350, %v1348
    %v1447 = vpack.c.b16 %v1351, %v1349
    %v1448 = vpack.c.b16 %v1354, %v1352
    %v1449 = vpack.c.b16 %v1355, %v1353
    %v1450 = vpack.c.b16 %v1358, %v1356
    %v1451 = vpack.c.b16 %v1359, %v1357
    %v1452 = vpack.c.b16 %v1362, %v1360
    %v1453 = vpack.c.b16 %v1363, %v1361
    %v1454 = vpack.c.b16 %v1366, %v1364
    %v1455 = vpack.c.b16 %v1367, %v1365
    %v1456 = vpack.c.b16 %v1370, %v1368
    %v1457 = vpack.c.b16 %v1371, %v1369
    %v1458 = vpack.c.b16 %v1374, %v1372
    %v1459 = vpack.c.b16 %v1375, %v1373
    %v1460 = vpack.c.b16 %v1378, %v1376
    %v1461 = vpack.c.b16 %v1379, %v1377
    %v1462 = vpack.c.b16 %v1382, %v1380
    %v1463 = vpack.c.b16 %v1383, %v1381
    %v1464 = vpack.c.b16 %v1386, %v1384
    %v1465 = vpack.c.b16 %v1387, %v1385
    %v1466 = vpack.c.b16 %v1390, %v1388
    %v1467 = vpack.c.b16 %v1391, %v1389
    %v1468 = vpack.c.b16 %v1394, %v1392
    %v1469 = vpack.c.b16 %v1395, %v1393
    %v1470 = vpack.c.b16 %v1398, %v1396
    %v1471 = vpack.c.b16 %v1399, %v1397
    %v1472 = vpack.c.b16 %v1402, %v1400
    %v1473 = vpack.c.b16 %v1403, %v1401
    %v1474 = vpack.c.b16 %v1406, %v1404
    %v1475 = vpack.c.b16 %v1407, %v1405
    %v1476 = vpack.c.b16 %v1410, %v1408
    %v1477 = vpack.c.b16 %v1411, %v1409
    %v1478 = vpack.c.b16 %v1414, %v1412
    %v1479 = vpack.c.b16 %v1415, %v1413
    %1544 = vmatprep.subr.bf16.mxu0 %v1417
    %1545 = vmatpush1.bf16.msra.mxu0 %v1416
    %1546 = vmatprep.subr.bf16.mxu0 %v1419
    %1547 = vmatpush1.bf16.msra.mxu0 %v1418
    %1548 = vmatprep.subr.bf16.mxu0 %v1421
    %1549 = vmatpush1.bf16.msra.mxu0 %v1420
    %1550 = vmatprep.subr.bf16.mxu0 %v1423
    %1551 = vmatpush1.bf16.msra.mxu0 %v1422
    %1552 = vmatprep.subr.bf16.mxu0 %v1425
    %1553 = vmatpush1.bf16.msra.mxu0 %v1424
    %1554 = vmatprep.subr.bf16.mxu0 %v1427
    %1555 = vmatpush1.bf16.msra.mxu0 %v1426
    %1556 = vmatprep.subr.bf16.mxu0 %v1429
    %1557 = vmatpush1.bf16.msra.mxu0 %v1428
    %1558 = vmatprep.subr.bf16.mxu0 %v1431
    %1559 = vmatpush1.bf16.msra.mxu0 %v1430
    %1560 = vmatprep.subr.bf16.mxu0 %v1433
    %1561 = vmatpush1.bf16.msra.mxu0 %v1432
    %1562 = vmatprep.subr.bf16.mxu0 %v1435
    %1563 = vmatpush1.bf16.msra.mxu0 %v1434
    %1564 = vmatprep.subr.bf16.mxu0 %v1437
    %1565 = vmatpush1.bf16.msra.mxu0 %v1436
    %1566 = vmatprep.subr.bf16.mxu0 %v1439
    %1567 = vmatpush1.bf16.msra.mxu0 %v1438
    %1568 = vmatprep.subr.bf16.mxu0 %v1441
    %1569 = vmatpush1.bf16.msra.mxu0 %v1440
    %1570 = vmatprep.subr.bf16.mxu0 %v1443
    %1571 = vmatpush1.bf16.msra.mxu0 %v1442
    %1572 = vmatprep.subr.bf16.mxu0 %v1445
    %1573 = vmatpush1.bf16.msra.mxu0 %v1444
    %1574 = vmatprep.subr.bf16.mxu0 %v1447
    %1575 = vmatpush1.bf16.msra.mxu0 %v1446
    %1576 = vmatprep.mubr.bf16.mxu0 %v1145
    %1577 = vmatmul.mubr.bf16.gmra.mrb[0].mxu0 %v1144
    %v1578 = vpop.f32.mrb[0].mxu0
    %v1579 = vadd.f32 %v1217, %v1578
    %v1580 = vpop.f32.mrb[0].mxu0
    %v1581 = vadd.f32 %v1221, %v1580
    %v1582 = vpop.f32.mrb[0].mxu0
    %v1583 = vpop.f32.mrb[0].mxu0
    %1584 = vdwg.mxu0
    %1585 = vmatprep.subr.bf16.mxu0 %v1449
    %1586 = vmatpush1.bf16.msra.mxu0 %v1448
    %1587 = vmatprep.subr.bf16.mxu0 %v1451
    %1588 = vmatpush1.bf16.msra.mxu0 %v1450
    %1589 = vmatprep.subr.bf16.mxu0 %v1453
    %1590 = vmatpush1.bf16.msra.mxu0 %v1452
    %1591 = vmatprep.subr.bf16.mxu0 %v1455
    %1592 = vmatpush1.bf16.msra.mxu0 %v1454
    %1593 = vmatprep.subr.bf16.mxu0 %v1457
    %1594 = vmatpush1.bf16.msra.mxu0 %v1456
    %1595 = vmatprep.subr.bf16.mxu0 %v1459
    %1596 = vmatpush1.bf16.msra.mxu0 %v1458
    %1597 = vmatprep.subr.bf16.mxu0 %v1461
    %1598 = vmatpush1.bf16.msra.mxu0 %v1460
    %1599 = vmatprep.subr.bf16.mxu0 %v1463
    %1600 = vmatpush1.bf16.msra.mxu0 %v1462
    %1601 = vmatprep.subr.bf16.mxu0 %v1465
    %1602 = vmatpush1.bf16.msra.mxu0 %v1464
    %1603 = vmatprep.subr.bf16.mxu0 %v1467
    %1604 = vmatpush1.bf16.msra.mxu0 %v1466
    %1605 = vmatprep.subr.bf16.mxu0 %v1469
    %1606 = vmatpush1.bf16.msra.mxu0 %v1468
    %1607 = vmatprep.subr.bf16.mxu0 %v1471
    %1608 = vmatpush1.bf16.msra.mxu0 %v1470
    %1609 = vmatprep.subr.bf16.mxu0 %v1473
    %1610 = vmatpush1.bf16.msra.mxu0 %v1472
    %1611 = vmatprep.subr.bf16.mxu0 %v1475
    %1612 = vmatpush1.bf16.msra.mxu0 %v1474
    %1613 = vmatprep.subr.bf16.mxu0 %v1477
    %1614 = vmatpush1.bf16.msra.mxu0 %v1476
    %1615 = vmatprep.subr.bf16.mxu0 %v1479
    %1616 = vmatpush1.bf16.msra.mxu0 %v1478
    %1617 = vmatprep.mubr.bf16.mxu0 %v1147
    %1618 = vmatmul.mubr.bf16.gmra.mrb[0].mxu0 %v1146
    %v1619 = vpop.f32.mrb[0].mxu0
    %v1620 = vadd.f32 %v1579, %v1619
    %v1621 = vpop.f32.mrb[0].mxu0
    %v1622 = vadd.f32 %v1581, %v1621
    %v1623 = vpop.f32.mrb[0].mxu0
    %v1624 = vpop.f32.mrb[0].mxu0
    %1625 = vdwg.mxu0
    %v1626 = vmax.f32 %v1620, 0.0
    %v1627 = vmax.f32 %v1622, 0.0
    %v1628 = vpack.c.bf16 %v1626, %v1626
    %v1629 = vpack.c.bf16 %v1627, %v1627
    %v1630 = vld [vmem:[#allocation8] sm:$0xff]
    %v1631 = vld [vmem:[#allocation8 + $0x8] sm:$0xff]
    %v1632 = vld [vmem:[#allocation8 + $0x10] sm:$0xff]
    %v1633 = vld [vmem:[#allocation8 + $0x18] sm:$0xff]
    %v1634 = vld [vmem:[#allocation8 + $0x20] sm:$0xff]
    %v1635 = vld [vmem:[#allocation8 + $0x28] sm:$0xff]
    %v1636 = vld [vmem:[#allocation8 + $0x30] sm:$0xff]
    %v1637 = vld [vmem:[#allocation8 + $0x38] sm:$0xff]
    %v1638 = vld [vmem:[#allocation8 + $0x40] sm:$0xff]
    %v1639 = vld [vmem:[#allocation8 + $0x48] sm:$0xff]
    %v1640 = vld [vmem:[#allocation8 + $0x50] sm:$0xff]
    %v1641 = vld [vmem:[#allocation8 + $0x58] sm:$0xff]
    %v1642 = vld [vmem:[#allocation8 + $0x60] sm:$0xff]
    %v1643 = vld [vmem:[#allocation8 + $0x68] sm:$0xff]
    %v1644 = vld [vmem:[#allocation8 + $0x70] sm:$0xff]
    %v1645 = vld [vmem:[#allocation8 + $0x78] sm:$0xff]
    %v1646 = vld [vmem:[#allocation8 + $0x80] sm:$0xff]
    %v1647 = vld [vmem:[#allocation8 + $0x88] sm:$0xff]
    %v1648 = vld [vmem:[#allocation8 + $0x90] sm:$0xff]
    %v1649 = vld [vmem:[#allocation8 + $0x98] sm:$0xff]
    %v1650 = vld [vmem:[#allocation8 + $0xa0] sm:$0xff]
    %v1651 = vld [vmem:[#allocation8 + $0xa8] sm:$0xff]
    %v1652 = vld [vmem:[#allocation8 + $0xb0] sm:$0xff]
    %v1653 = vld [vmem:[#allocation8 + $0xb8] sm:$0xff]
    %v1654 = vld [vmem:[#allocation8 + $0xc0] sm:$0xff]
    %v1655 = vld [vmem:[#allocation8 + $0xc8] sm:$0xff]
    %v1656 = vld [vmem:[#allocation8 + $0xd0] sm:$0xff]
    %v1657 = vld [vmem:[#allocation8 + $0xd8] sm:$0xff]
    %v1658 = vld [vmem:[#allocation8 + $0xe0] sm:$0xff]
    %v1659 = vld [vmem:[#allocation8 + $0xe8] sm:$0xff]
    %v1660 = vld [vmem:[#allocation8 + $0xf0] sm:$0xff]
    %v1661 = vld [vmem:[#allocation8 + $0xf8] sm:$0xff]
    %v1662 = vld [vmem:[%s6] sm:$0x3]
    %v1664 = vlaneseq
    %v1665 = vshrl.u32 %v1664, 7
    %v1666 = vsub.s32 0, %v1665
    %v1667 = vrot.slane %v1662, %v1666
    %v1668 = vlaneseq
    %v1669 = vshrl.u32 %v1668, 7
    %v1670 = vsub.s32 1, %v1669
    %v1671 = vrot.slane %v1662, %v1670
    %v1706 = vunpack.c.l.b16 %v1630
    %v1707 = vunpack.c.h.b16 %v1630
    %v1708 = vunpack.c.l.b16 %v1631
    %v1709 = vunpack.c.h.b16 %v1631
    %v1710 = vunpack.c.l.b16 %v1632
    %v1711 = vunpack.c.h.b16 %v1632
    %v1712 = vunpack.c.l.b16 %v1633
    %v1713 = vunpack.c.h.b16 %v1633
    %v1714 = vunpack.c.l.b16 %v1634
    %v1715 = vunpack.c.h.b16 %v1634
    %v1716 = vunpack.c.l.b16 %v1635
    %v1717 = vunpack.c.h.b16 %v1635
    %v1718 = vunpack.c.l.b16 %v1636
    %v1719 = vunpack.c.h.b16 %v1636
    %v1720 = vunpack.c.l.b16 %v1637
    %v1721 = vunpack.c.h.b16 %v1637
    %v1722 = vunpack.c.l.b16 %v1638
    %v1723 = vunpack.c.h.b16 %v1638
    %v1724 = vunpack.c.l.b16 %v1639
    %v1725 = vunpack.c.h.b16 %v1639
    %v1726 = vunpack.c.l.b16 %v1640
    %v1727 = vunpack.c.h.b16 %v1640
    %v1728 = vunpack.c.l.b16 %v1641
    %v1729 = vunpack.c.h.b16 %v1641
    %v1730 = vunpack.c.l.b16 %v1642
    %v1731 = vunpack.c.h.b16 %v1642
    %v1732 = vunpack.c.l.b16 %v1643
    %v1733 = vunpack.c.h.b16 %v1643
    %v1734 = vunpack.c.l.b16 %v1644
    %v1735 = vunpack.c.h.b16 %v1644
    %v1736 = vunpack.c.l.b16 %v1645
    %v1737 = vunpack.c.h.b16 %v1645
    %v1738 = vunpack.c.l.b16 %v1646
    %v1739 = vunpack.c.h.b16 %v1646
    %v1740 = vunpack.c.l.b16 %v1647
    %v1741 = vunpack.c.h.b16 %v1647
    %v1742 = vunpack.c.l.b16 %v1648
    %v1743 = vunpack.c.h.b16 %v1648
    %v1744 = vunpack.c.l.b16 %v1649
    %v1745 = vunpack.c.h.b16 %v1649
    %v1746 = vunpack.c.l.b16 %v1650
    %v1747 = vunpack.c.h.b16 %v1650
    %v1748 = vunpack.c.l.b16 %v1651
    %v1749 = vunpack.c.h.b16 %v1651
    %v1750 = vunpack.c.l.b16 %v1652
    %v1751 = vunpack.c.h.b16 %v1652
    %v1752 = vunpack.c.l.b16 %v1653
    %v1753 = vunpack.c.h.b16 %v1653
    %v1754 = vunpack.c.l.b16 %v1654
    %v1755 = vunpack.c.h.b16 %v1654
    %v1756 = vunpack.c.l.b16 %v1655
    %v1757 = vunpack.c.h.b16 %v1655
    %v1758 = vunpack.c.l.b16 %v1656
    %v1759 = vunpack.c.h.b16 %v1656
    %v1760 = vunpack.c.l.b16 %v1657
    %v1761 = vunpack.c.h.b16 %v1657
    %v1762 = vunpack.c.l.b16 %v1658
    %v1763 = vunpack.c.h.b16 %v1658
    %v1764 = vunpack.c.l.b16 %v1659
    %v1765 = vunpack.c.h.b16 %v1659
    %v1766 = vunpack.c.l.b16 %v1660
    %v1767 = vunpack.c.h.b16 %v1660
    %v1768 = vunpack.c.l.b16 %v1661
    %v1769 = vunpack.c.h.b16 %v1661
    %v1770 = vpack.c.b16 %v1708, %v1706
    %v1771 = vpack.c.b16 %v1709, %v1707
    %v1772 = vpack.c.b16 %v1712, %v1710
    %v1773 = vpack.c.b16 %v1713, %v1711
    %v1774 = vpack.c.b16 %v1716, %v1714
    %v1775 = vpack.c.b16 %v1717, %v1715
    %v1776 = vpack.c.b16 %v1720, %v1718
    %v1777 = vpack.c.b16 %v1721, %v1719
    %v1778 = vpack.c.b16 %v1724, %v1722
    %v1779 = vpack.c.b16 %v1725, %v1723
    %v1780 = vpack.c.b16 %v1728, %v1726
    %v1781 = vpack.c.b16 %v1729, %v1727
    %v1782 = vpack.c.b16 %v1732, %v1730
    %v1783 = vpack.c.b16 %v1733, %v1731
    %v1784 = vpack.c.b16 %v1736, %v1734
    %v1785 = vpack.c.b16 %v1737, %v1735
    %v1786 = vpack.c.b16 %v1740, %v1738
    %v1787 = vpack.c.b16 %v1741, %v1739
    %v1788 = vpack.c.b16 %v1744, %v1742
    %v1789 = vpack.c.b16 %v1745, %v1743
    %v1790 = vpack.c.b16 %v1748, %v1746
    %v1791 = vpack.c.b16 %v1749, %v1747
    %v1792 = vpack.c.b16 %v1752, %v1750
    %v1793 = vpack.c.b16 %v1753, %v1751
    %v1794 = vpack.c.b16 %v1756, %v1754
    %v1795 = vpack.c.b16 %v1757, %v1755
    %v1796 = vpack.c.b16 %v1760, %v1758
    %v1797 = vpack.c.b16 %v1761, %v1759
    %v1798 = vpack.c.b16 %v1764, %v1762
    %v1799 = vpack.c.b16 %v1765, %v1763
    %v1800 = vpack.c.b16 %v1768, %v1766
    %v1801 = vpack.c.b16 %v1769, %v1767
    %1834 = vmatprep.subr.bf16.mxu0 %v1771
    %1835 = vmatpush1.bf16.msra.mxu0 %v1770
    %1836 = vmatprep.subr.bf16.mxu0 %v1773
    %1837 = vmatpush1.bf16.msra.mxu0 %v1772
    %1838 = vmatprep.subr.bf16.mxu0 %v1775
    %1839 = vmatpush1.bf16.msra.mxu0 %v1774
    %1840 = vmatprep.subr.bf16.mxu0 %v1777
    %1841 = vmatpush1.bf16.msra.mxu0 %v1776
    %1842 = vmatprep.subr.bf16.mxu0 %v1779
    %1843 = vmatpush1.bf16.msra.mxu0 %v1778
    %1844 = vmatprep.subr.bf16.mxu0 %v1781
    %1845 = vmatpush1.bf16.msra.mxu0 %v1780
    %1846 = vmatprep.subr.bf16.mxu0 %v1783
    %1847 = vmatpush1.bf16.msra.mxu0 %v1782
    %1848 = vmatprep.subr.bf16.mxu0 %v1785
    %1849 = vmatpush1.bf16.msra.mxu0 %v1784
    %1850 = vmatprep.subr.bf16.mxu0 %v1787
    %1851 = vmatpush1.bf16.msra.mxu0 %v1786
    %1852 = vmatprep.subr.bf16.mxu0 %v1789
    %1853 = vmatpush1.bf16.msra.mxu0 %v1788
    %1854 = vmatprep.subr.bf16.mxu0 %v1791
    %1855 = vmatpush1.bf16.msra.mxu0 %v1790
    %1856 = vmatprep.subr.bf16.mxu0 %v1793
    %1857 = vmatpush1.bf16.msra.mxu0 %v1792
    %1858 = vmatprep.subr.bf16.mxu0 %v1795
    %1859 = vmatpush1.bf16.msra.mxu0 %v1794
    %1860 = vmatprep.subr.bf16.mxu0 %v1797
    %1861 = vmatpush1.bf16.msra.mxu0 %v1796
    %1862 = vmatprep.subr.bf16.mxu0 %v1799
    %1863 = vmatpush1.bf16.msra.mxu0 %v1798
    %1864 = vmatprep.subr.bf16.mxu0 %v1801
    %1865 = vmatpush1.bf16.msra.mxu0 %v1800
    %1866 = vmatprep.mubr.bf16.mxu0 %v1629
    %1867 = vmatmul.mubr.bf16.gmra.mrb[0].mxu0 %v1628
    %v1868 = vpop.f32.mrb[0].mxu0
    %v1869 = vadd.f32 %v1667, %v1868
    %v1870 = vpop.f32.mrb[0].mxu0
    %v1871 = vadd.f32 %v1671, %v1870
    %v1872 = vpop.f32.mrb[0].mxu0
    %v1873 = vpop.f32.mrb[0].mxu0
    %1874 = vdwg.mxu0
    %v1875 = vmax.f32 %v1869, 0.0
    %v1876 = vmax.f32 %v1871, 0.0
    %v1877 = vld [vmem:[#allocation10] sm:$0xff]
    %v1878 = vld [vmem:[#allocation10 + $0x8] sm:$0xff]
    %v1879 = vld [vmem:[#allocation10 + $0x10] sm:$0xff]
    %v1880 = vld [vmem:[#allocation10 + $0x18] sm:$0xff]
    %v1881 = vld [vmem:[#allocation10 + $0x20] sm:$0xff]
    %v1882 = vld [vmem:[#allocation10 + $0x28] sm:$0xff]
    %v1883 = vld [vmem:[#allocation10 + $0x30] sm:$0xff]
    %v1884 = vld [vmem:[#allocation10 + $0x38] sm:$0xff]
    %v1885 = vld [vmem:[#allocation10 + $0x40] sm:$0xff]
    %v1886 = vld [vmem:[#allocation10 + $0x48] sm:$0xff]
    %v1887 = vld [vmem:[#allocation10 + $0x50] sm:$0xff]
    %v1888 = vld [vmem:[#allocation10 + $0x58] sm:$0xff]
    %v1889 = vld [vmem:[#allocation10 + $0x60] sm:$0xff]
    %v1890 = vld [vmem:[#allocation10 + $0x68] sm:$0xff]
    %v1891 = vld [vmem:[#allocation10 + $0x70] sm:$0xff]
    %v1892 = vld [vmem:[#allocation10 + $0x78] sm:$0xff]
    %v1893 = vld [vmem:[#allocation10 + $0x80] sm:$0xff]
    %v1894 = vld [vmem:[#allocation10 + $0x88] sm:$0xff]
    %v1895 = vld [vmem:[#allocation10 + $0x90] sm:$0xff]
    %v1896 = vld [vmem:[#allocation10 + $0x98] sm:$0xff]
    %v1897 = vld [vmem:[#allocation10 + $0xa0] sm:$0xff]
    %v1898 = vld [vmem:[#allocation10 + $0xa8] sm:$0xff]
    %v1899 = vld [vmem:[#allocation10 + $0xb0] sm:$0xff]
    %v1900 = vld [vmem:[#allocation10 + $0xb8] sm:$0xff]
    %v1901 = vld [vmem:[#allocation10 + $0xc0] sm:$0xff]
    %v1902 = vld [vmem:[#allocation10 + $0xc8] sm:$0xff]
    %v1903 = vld [vmem:[#allocation10 + $0xd0] sm:$0xff]
    %v1904 = vld [vmem:[#allocation10 + $0xd8] sm:$0xff]
    %v1905 = vld [vmem:[#allocation10 + $0xe0] sm:$0xff]
    %v1906 = vld [vmem:[#allocation10 + $0xe8] sm:$0xff]
    %v1907 = vld [vmem:[#allocation10 + $0xf0] sm:$0xff]
    %v1908 = vld [vmem:[#allocation10 + $0xf8] sm:$0xff]
    %v1909 = vld [vmem:[%s8] sm:$0x3]
    %v1911 = vlaneseq
    %v1912 = vshrl.u32 %v1911, 7
    %v1913 = vsub.s32 0, %v1912
    %v1914 = vrot.slane %v1909, %v1913
    %v1915 = vlaneseq
    %v1916 = vshrl.u32 %v1915, 7
    %v1917 = vsub.s32 1, %v1916
    %v1918 = vrot.slane %v1909, %v1917
    %v1953 = vunpack.c.l.b16 %v1877
    %v1954 = vunpack.c.h.b16 %v1877
    %v1955 = vunpack.c.l.b16 %v1878
    %v1956 = vunpack.c.h.b16 %v1878
    %v1957 = vunpack.c.l.b16 %v1879
    %v1958 = vunpack.c.h.b16 %v1879
    %v1959 = vunpack.c.l.b16 %v1880
    %v1960 = vunpack.c.h.b16 %v1880
    %v1961 = vunpack.c.l.b16 %v1881
    %v1962 = vunpack.c.h.b16 %v1881
    %v1963 = vunpack.c.l.b16 %v1882
    %v1964 = vunpack.c.h.b16 %v1882
    %v1965 = vunpack.c.l.b16 %v1883
    %v1966 = vunpack.c.h.b16 %v1883
    %v1967 = vunpack.c.l.b16 %v1884
    %v1968 = vunpack.c.h.b16 %v1884
    %v1969 = vunpack.c.l.b16 %v1885
    %v1970 = vunpack.c.h.b16 %v1885
    %v1971 = vunpack.c.l.b16 %v1886
    %v1972 = vunpack.c.h.b16 %v1886
    %v1973 = vunpack.c.l.b16 %v1887
    %v1974 = vunpack.c.h.b16 %v1887
    %v1975 = vunpack.c.l.b16 %v1888
    %v1976 = vunpack.c.h.b16 %v1888
    %v1977 = vunpack.c.l.b16 %v1889
    %v1978 = vunpack.c.h.b16 %v1889
    %v1979 = vunpack.c.l.b16 %v1890
    %v1980 = vunpack.c.h.b16 %v1890
    %v1981 = vunpack.c.l.b16 %v1891
    %v1982 = vunpack.c.h.b16 %v1891
    %v1983 = vunpack.c.l.b16 %v1892
    %v1984 = vunpack.c.h.b16 %v1892
    %v1985 = vunpack.c.l.b16 %v1893
    %v1986 = vunpack.c.h.b16 %v1893
    %v1987 = vunpack.c.l.b16 %v1894
    %v1988 = vunpack.c.h.b16 %v1894
    %v1989 = vunpack.c.l.b16 %v1895
    %v1990 = vunpack.c.h.b16 %v1895
    %v1991 = vunpack.c.l.b16 %v1896
    %v1992 = vunpack.c.h.b16 %v1896
    %v1993 = vunpack.c.l.b16 %v1897
    %v1994 = vunpack.c.h.b16 %v1897
    %v1995 = vunpack.c.l.b16 %v1898
    %v1996 = vunpack.c.h.b16 %v1898
    %v1997 = vunpack.c.l.b16 %v1899
    %v1998 = vunpack.c.h.b16 %v1899
    %v1999 = vunpack.c.l.b16 %v1900
    %v2000 = vunpack.c.h.b16 %v1900
    %v2001 = vunpack.c.l.b16 %v1901
    %v2002 = vunpack.c.h.b16 %v1901
    %v2003 = vunpack.c.l.b16 %v1902
    %v2004 = vunpack.c.h.b16 %v1902
    %v2005 = vunpack.c.l.b16 %v1903
    %v2006 = vunpack.c.h.b16 %v1903
    %v2007 = vunpack.c.l.b16 %v1904
    %v2008 = vunpack.c.h.b16 %v1904
    %v2009 = vunpack.c.l.b16 %v1905
    %v2010 = vunpack.c.h.b16 %v1905
    %v2011 = vunpack.c.l.b16 %v1906
    %v2012 = vunpack.c.h.b16 %v1906
    %v2013 = vunpack.c.l.b16 %v1907
    %v2014 = vunpack.c.h.b16 %v1907
    %v2015 = vunpack.c.l.b16 %v1908
    %v2016 = vunpack.c.h.b16 %v1908
    %v2017 = vpack.c.b16 %v1955, %v1953
    %v2018 = vpack.c.b16 %v1956, %v1954
    %v2019 = vpack.c.b16 %v1959, %v1957
    %v2020 = vpack.c.b16 %v1960, %v1958
    %v2021 = vpack.c.b16 %v1963, %v1961
    %v2022 = vpack.c.b16 %v1964, %v1962
    %v2023 = vpack.c.b16 %v1967, %v1965
    %v2024 = vpack.c.b16 %v1968, %v1966
    %v2025 = vpack.c.b16 %v1971, %v1969
    %v2026 = vpack.c.b16 %v1972, %v1970
    %v2027 = vpack.c.b16 %v1975, %v1973
    %v2028 = vpack.c.b16 %v1976, %v1974
    %v2029 = vpack.c.b16 %v1979, %v1977
    %v2030 = vpack.c.b16 %v1980, %v1978
    %v2031 = vpack.c.b16 %v1983, %v1981
    %v2032 = vpack.c.b16 %v1984, %v1982
    %v2033 = vpack.c.b16 %v1987, %v1985
    %v2034 = vpack.c.b16 %v1988, %v1986
    %v2035 = vpack.c.b16 %v1991, %v1989
    %v2036 = vpack.c.b16 %v1992, %v1990
    %v2037 = vpack.c.b16 %v1995, %v1993
    %v2038 = vpack.c.b16 %v1996, %v1994
    %v2039 = vpack.c.b16 %v1999, %v1997
    %v2040 = vpack.c.b16 %v2000, %v1998
    %v2041 = vpack.c.b16 %v2003, %v2001
    %v2042 = vpack.c.b16 %v2004, %v2002
    %v2043 = vpack.c.b16 %v2007, %v2005
    %v2044 = vpack.c.b16 %v2008, %v2006
    %v2045 = vpack.c.b16 %v2011, %v2009
    %v2046 = vpack.c.b16 %v2012, %v2010
    %v2047 = vpack.c.b16 %v2015, %v2013
    %v2048 = vpack.c.b16 %v2016, %v2014
    %2081 = vmatprep.subr.bf16.mxu0 %v2018
    %2082 = vmatpush1.bf16.msra.mxu0 %v2017
    %2083 = vmatprep.subr.bf16.mxu0 %v2020
    %2084 = vmatpush1.bf16.msra.mxu0 %v2019
    %2085 = vmatprep.subr.bf16.mxu0 %v2022
    %2086 = vmatpush1.bf16.msra.mxu0 %v2021
    %2087 = vmatprep.subr.bf16.mxu0 %v2024
    %2088 = vmatpush1.bf16.msra.mxu0 %v2023
    %2089 = vmatprep.subr.bf16.mxu0 %v2026
    %2090 = vmatpush1.bf16.msra.mxu0 %v2025
    %2091 = vmatprep.subr.bf16.mxu0 %v2028
    %2092 = vmatpush1.bf16.msra.mxu0 %v2027
    %2093 = vmatprep.subr.bf16.mxu0 %v2030
    %2094 = vmatpush1.bf16.msra.mxu0 %v2029
    %2095 = vmatprep.subr.bf16.mxu0 %v2032
    %2096 = vmatpush1.bf16.msra.mxu0 %v2031
    %2097 = vmatprep.subr.bf16.mxu0 %v2034
    %2098 = vmatpush1.bf16.msra.mxu0 %v2033
    %2099 = vmatprep.subr.bf16.mxu0 %v2036
    %2100 = vmatpush1.bf16.msra.mxu0 %v2035
    %2101 = vmatprep.subr.bf16.mxu0 %v2038
    %2102 = vmatpush1.bf16.msra.mxu0 %v2037
    %2103 = vmatprep.subr.bf16.mxu0 %v2040
    %2104 = vmatpush1.bf16.msra.mxu0 %v2039
    %2105 = vmatprep.subr.bf16.mxu0 %v2042
    %2106 = vmatpush1.bf16.msra.mxu0 %v2041
    %2107 = vmatprep.subr.bf16.mxu0 %v2044
    %2108 = vmatpush1.bf16.msra.mxu0 %v2043
    %2109 = vmatprep.subr.bf16.mxu0 %v2046
    %2110 = vmatpush1.bf16.msra.mxu0 %v2045
    %2111 = vmatprep.subr.bf16.mxu0 %v2048
    %2112 = vmatpush1.bf16.msra.mxu0 %v2047
    %2113 = vmatprep.mubr.bf16.mxu0 %v1629
    %2114 = vmatmul.mubr.bf16.gmra.mrb[0].mxu0 %v1628
    %v2115 = vpop.f32.mrb[0].mxu0
    %v2116 = vadd.f32 %v1914, %v2115
    %v2117 = vpop.f32.mrb[0].mxu0
    %v2118 = vadd.f32 %v1918, %v2117
    %v2119 = vpop.f32.mrb[0].mxu0
    %v2120 = vpop.f32.mrb[0].mxu0
    %2121 = vdwg.mxu0
    %v2122 = vmax.f32 %v2116, 0.0
    %v2123 = vmax.f32 %v2118, 0.0
    %v2124 = vpack.c.bf16 %v1875, %v1875
    %v2125 = vpack.c.bf16 %v1876, %v1876
    %v2126 = vld [vmem:[#allocation11] sm:$0xf]
    %v2127 = vld [vmem:[#allocation11 + $0x4] sm:$0xf]
    %v2128 = vld [vmem:[#allocation11 + $0x8] sm:$0xf]
    %v2129 = vld [vmem:[#allocation11 + $0xc] sm:$0xf]
    %v2130 = vld [vmem:[#allocation11 + $0x10] sm:$0xf]
    %v2131 = vld [vmem:[#allocation11 + $0x14] sm:$0xf]
    %v2132 = vld [vmem:[#allocation11 + $0x18] sm:$0xf]
    %v2133 = vld [vmem:[#allocation11 + $0x1c] sm:$0xf]
    %v2134 = vld [vmem:[#allocation11 + $0x20] sm:$0xf]
    %v2135 = vld [vmem:[#allocation11 + $0x24] sm:$0xf]
    %v2136 = vld [vmem:[#allocation11 + $0x28] sm:$0xf]
    %v2137 = vld [vmem:[#allocation11 + $0x2c] sm:$0xf]
    %v2138 = vld [vmem:[#allocation11 + $0x30] sm:$0xf]
    %v2139 = vld [vmem:[#allocation11 + $0x34] sm:$0xf]
    %v2140 = vld [vmem:[#allocation11 + $0x38] sm:$0xf]
    %v2141 = vld [vmem:[#allocation11 + $0x3c] sm:$0xf]
    %v2142 = vld [vmem:[#allocation11 + $0x40] sm:$0xf]
    %v2143 = vld [vmem:[#allocation11 + $0x44] sm:$0xf]
    %v2144 = vld [vmem:[#allocation11 + $0x48] sm:$0xf]
    %v2145 = vld [vmem:[#allocation11 + $0x4c] sm:$0xf]
    %v2146 = vld [vmem:[#allocation11 + $0x50] sm:$0xf]
    %v2147 = vld [vmem:[#allocation11 + $0x54] sm:$0xf]
    %v2148 = vld [vmem:[#allocation11 + $0x58] sm:$0xf]
    %v2149 = vld [vmem:[#allocation11 + $0x5c] sm:$0xf]
    %v2150 = vld [vmem:[#allocation11 + $0x60] sm:$0xf]
    %v2151 = vld [vmem:[#allocation11 + $0x64] sm:$0xf]
    %v2152 = vld [vmem:[#allocation11 + $0x68] sm:$0xf]
    %v2153 = vld [vmem:[#allocation11 + $0x6c] sm:$0xf]
    %v2154 = vld [vmem:[#allocation11 + $0x70] sm:$0xf]
    %v2155 = vld [vmem:[#allocation11 + $0x74] sm:$0xf]
    %v2156 = vld [vmem:[#allocation11 + $0x78] sm:$0xf]
    %v2157 = vld [vmem:[#allocation11 + $0x7c] sm:$0xf]
    %v2158 = vld [vmem:[%s10] sm:$0x1]
    %v2160 = vlaneseq
    %v2161 = vshrl.u32 %v2160, 7
    %v2162 = vsub.s32 0, %v2161
    %v2163 = vrot.slane %v2158, %v2162
    %v2197 = vunpack.c.l.b16 %v2126
    %v2198 = vunpack.c.l.b16 %v2127
    %v2199 = vunpack.c.l.b16 %v2128
    %v2200 = vunpack.c.l.b16 %v2129
    %v2201 = vunpack.c.l.b16 %v2130
    %v2202 = vunpack.c.l.b16 %v2131
    %v2203 = vunpack.c.l.b16 %v2132
    %v2204 = vunpack.c.l.b16 %v2133
    %v2205 = vunpack.c.l.b16 %v2134
    %v2206 = vunpack.c.l.b16 %v2135
    %v2207 = vunpack.c.l.b16 %v2136
    %v2208 = vunpack.c.l.b16 %v2137
    %v2209 = vunpack.c.l.b16 %v2138
    %v2210 = vunpack.c.l.b16 %v2139
    %v2211 = vunpack.c.l.b16 %v2140
    %v2212 = vunpack.c.l.b16 %v2141
    %v2213 = vunpack.c.l.b16 %v2142
    %v2214 = vunpack.c.l.b16 %v2143
    %v2215 = vunpack.c.l.b16 %v2144
    %v2216 = vunpack.c.l.b16 %v2145
    %v2217 = vunpack.c.l.b16 %v2146
    %v2218 = vunpack.c.l.b16 %v2147
    %v2219 = vunpack.c.l.b16 %v2148
    %v2220 = vunpack.c.l.b16 %v2149
    %v2221 = vunpack.c.l.b16 %v2150
    %v2222 = vunpack.c.l.b16 %v2151
    %v2223 = vunpack.c.l.b16 %v2152
    %v2224 = vunpack.c.l.b16 %v2153
    %v2225 = vunpack.c.l.b16 %v2154
    %v2226 = vunpack.c.l.b16 %v2155
    %v2227 = vunpack.c.l.b16 %v2156
    %v2228 = vunpack.c.l.b16 %v2157
    %v2229 = vpack.c.b16 %v2198, %v2197
    %v2230 = vpack.c.b16 %v2200, %v2199
    %v2231 = vpack.c.b16 %v2202, %v2201
    %v2232 = vpack.c.b16 %v2204, %v2203
    %v2233 = vpack.c.b16 %v2206, %v2205
    %v2234 = vpack.c.b16 %v2208, %v2207
    %v2235 = vpack.c.b16 %v2210, %v2209
    %v2236 = vpack.c.b16 %v2212, %v2211
    %v2237 = vpack.c.b16 %v2214, %v2213
    %v2238 = vpack.c.b16 %v2216, %v2215
    %v2239 = vpack.c.b16 %v2218, %v2217
    %v2240 = vpack.c.b16 %v2220, %v2219
    %v2241 = vpack.c.b16 %v2222, %v2221
    %v2242 = vpack.c.b16 %v2224, %v2223
    %v2243 = vpack.c.b16 %v2226, %v2225
    %v2244 = vpack.c.b16 %v2228, %v2227
    %2261 = vmatprep.subr.bf16.mxu0 0
    %2262 = vmatpush1.bf16.msra.mxu0 %v2229
    %2263 = vmatprep.subr.bf16.mxu0 0
    %2264 = vmatpush1.bf16.msra.mxu0 %v2230
    %2265 = vmatprep.subr.bf16.mxu0 0
    %2266 = vmatpush1.bf16.msra.mxu0 %v2231
    %2267 = vmatprep.subr.bf16.mxu0 0
    %2268 = vmatpush1.bf16.msra.mxu0 %v2232
    %2269 = vmatprep.subr.bf16.mxu0 0
    %2270 = vmatpush1.bf16.msra.mxu0 %v2233
    %2271 = vmatprep.subr.bf16.mxu0 0
    %2272 = vmatpush1.bf16.msra.mxu0 %v2234
    %2273 = vmatprep.subr.bf16.mxu0 0
    %2274 = vmatpush1.bf16.msra.mxu0 %v2235
    %2275 = vmatprep.subr.bf16.mxu0 0
    %2276 = vmatpush1.bf16.msra.mxu0 %v2236
    %2277 = vmatprep.subr.bf16.mxu0 0
    %2278 = vmatpush1.bf16.msra.mxu0 %v2237
    %2279 = vmatprep.subr.bf16.mxu0 0
    %2280 = vmatpush1.bf16.msra.mxu0 %v2238
    %2281 = vmatprep.subr.bf16.mxu0 0
    %2282 = vmatpush1.bf16.msra.mxu0 %v2239
    %2283 = vmatprep.subr.bf16.mxu0 0
    %2284 = vmatpush1.bf16.msra.mxu0 %v2240
    %2285 = vmatprep.subr.bf16.mxu0 0
    %2286 = vmatpush1.bf16.msra.mxu0 %v2241
    %2287 = vmatprep.subr.bf16.mxu0 0
    %2288 = vmatpush1.bf16.msra.mxu0 %v2242
    %2289 = vmatprep.subr.bf16.mxu0 0
    %2290 = vmatpush1.bf16.msra.mxu0 %v2243
    %2291 = vmatprep.subr.bf16.mxu0 0
    %2292 = vmatpush1.bf16.msra.mxu0 %v2244
    %2293 = vmatprep.mubr.bf16.mxu0 %v2125
    %2294 = vmatmul.mubr.bf16.gmra.mrb[0].mxu0 %v2124
    %v2295 = vpop.f32.mrb[0].mxu0
    %v2296 = vadd.f32 %v2163, %v2295
    %v2297 = vpop.f32.mrb[0].mxu0
    %v2298 = vpop.f32.mrb[0].mxu0
    %v2299 = vpop.f32.mrb[0].mxu0
    %2300 = vdwg.mxu0
    %v2301 = vld [vmem:[#allocation13] sm:$0xf]
    %v2302 = vld [vmem:[#allocation13 + $0x4] sm:$0xf]
    %v2303 = vld [vmem:[#allocation13 + $0x8] sm:$0xf]
    %v2304 = vld [vmem:[#allocation13 + $0xc] sm:$0xf]
    %v2305 = vld [vmem:[#allocation13 + $0x10] sm:$0xf]
    %v2306 = vld [vmem:[#allocation13 + $0x14] sm:$0xf]
    %v2307 = vld [vmem:[#allocation13 + $0x18] sm:$0xf]
    %v2308 = vld [vmem:[#allocation13 + $0x1c] sm:$0xf]
    %v2309 = vld [vmem:[#allocation13 + $0x20] sm:$0xf]
    %v2310 = vld [vmem:[#allocation13 + $0x24] sm:$0xf]
    %v2311 = vld [vmem:[#allocation13 + $0x28] sm:$0xf]
    %v2312 = vld [vmem:[#allocation13 + $0x2c] sm:$0xf]
    %v2313 = vld [vmem:[#allocation13 + $0x30] sm:$0xf]
    %v2314 = vld [vmem:[#allocation13 + $0x34] sm:$0xf]
    %v2315 = vld [vmem:[#allocation13 + $0x38] sm:$0xf]
    %v2316 = vld [vmem:[#allocation13 + $0x3c] sm:$0xf]
    %v2317 = vld [vmem:[#allocation13 + $0x40] sm:$0xf]
    %v2318 = vld [vmem:[#allocation13 + $0x44] sm:$0xf]
    %v2319 = vld [vmem:[#allocation13 + $0x48] sm:$0xf]
    %v2320 = vld [vmem:[#allocation13 + $0x4c] sm:$0xf]
    %v2321 = vld [vmem:[#allocation13 + $0x50] sm:$0xf]
    %v2322 = vld [vmem:[#allocation13 + $0x54] sm:$0xf]
    %v2323 = vld [vmem:[#allocation13 + $0x58] sm:$0xf]
    %v2324 = vld [vmem:[#allocation13 + $0x5c] sm:$0xf]
    %v2325 = vld [vmem:[#allocation13 + $0x60] sm:$0xf]
    %v2326 = vld [vmem:[#allocation13 + $0x64] sm:$0xf]
    %v2327 = vld [vmem:[#allocation13 + $0x68] sm:$0xf]
    %v2328 = vld [vmem:[#allocation13 + $0x6c] sm:$0xf]
    %v2329 = vld [vmem:[#allocation13 + $0x70] sm:$0xf]
    %v2330 = vld [vmem:[#allocation13 + $0x74] sm:$0xf]
    %v2331 = vld [vmem:[#allocation13 + $0x78] sm:$0xf]
    %v2332 = vld [vmem:[#allocation13 + $0x7c] sm:$0xf]
    %v2333 = vld [vmem:[%s12] sm:$0x1]
    %v2335 = vlaneseq
    %v2336 = vshrl.u32 %v2335, 7
    %v2337 = vsub.s32 0, %v2336
    %v2338 = vrot.slane %v2333, %v2337
    %v2372 = vunpack.c.l.b16 %v2301
    %v2373 = vunpack.c.l.b16 %v2302
    %v2374 = vunpack.c.l.b16 %v2303
    %v2375 = vunpack.c.l.b16 %v2304
    %v2376 = vunpack.c.l.b16 %v2305
    %v2377 = vunpack.c.l.b16 %v2306
    %v2378 = vunpack.c.l.b16 %v2307
    %v2379 = vunpack.c.l.b16 %v2308
    %v2380 = vunpack.c.l.b16 %v2309
    %v2381 = vunpack.c.l.b16 %v2310
    %v2382 = vunpack.c.l.b16 %v2311
    %v2383 = vunpack.c.l.b16 %v2312
    %v2384 = vunpack.c.l.b16 %v2313
    %v2385 = vunpack.c.l.b16 %v2314
    %v2386 = vunpack.c.l.b16 %v2315
    %v2387 = vunpack.c.l.b16 %v2316
    %v2388 = vunpack.c.l.b16 %v2317
    %v2389 = vunpack.c.l.b16 %v2318
    %v2390 = vunpack.c.l.b16 %v2319
    %v2391 = vunpack.c.l.b16 %v2320
    %v2392 = vunpack.c.l.b16 %v2321
    %v2393 = vunpack.c.l.b16 %v2322
    %v2394 = vunpack.c.l.b16 %v2323
    %v2395 = vunpack.c.l.b16 %v2324
    %v2396 = vunpack.c.l.b16 %v2325
    %v2397 = vunpack.c.l.b16 %v2326
    %v2398 = vunpack.c.l.b16 %v2327
    %v2399 = vunpack.c.l.b16 %v2328
    %v2400 = vunpack.c.l.b16 %v2329
    %v2401 = vunpack.c.l.b16 %v2330
    %v2402 = vunpack.c.l.b16 %v2331
    %v2403 = vunpack.c.l.b16 %v2332
    %v2404 = vpack.c.b16 %v2373, %v2372
    %v2405 = vpack.c.b16 %v2375, %v2374
    %v2406 = vpack.c.b16 %v2377, %v2376
    %v2407 = vpack.c.b16 %v2379, %v2378
    %v2408 = vpack.c.b16 %v2381, %v2380
    %v2409 = vpack.c.b16 %v2383, %v2382
    %v2410 = vpack.c.b16 %v2385, %v2384
    %v2411 = vpack.c.b16 %v2387, %v2386
    %v2412 = vpack.c.b16 %v2389, %v2388
    %v2413 = vpack.c.b16 %v2391, %v2390
    %v2414 = vpack.c.b16 %v2393, %v2392
    %v2415 = vpack.c.b16 %v2395, %v2394
    %v2416 = vpack.c.b16 %v2397, %v2396
    %v2417 = vpack.c.b16 %v2399, %v2398
    %v2418 = vpack.c.b16 %v2401, %v2400
    %v2419 = vpack.c.b16 %v2403, %v2402
    %2436 = vmatprep.subr.bf16.mxu0 0
    %2437 = vmatpush1.bf16.msra.mxu0 %v2404
    %2438 = vmatprep.subr.bf16.mxu0 0
    %2439 = vmatpush1.bf16.msra.mxu0 %v2405
    %2440 = vmatprep.subr.bf16.mxu0 0
    %2441 = vmatpush1.bf16.msra.mxu0 %v2406
    %2442 = vmatprep.subr.bf16.mxu0 0
    %2443 = vmatpush1.bf16.msra.mxu0 %v2407
    %2444 = vmatprep.subr.bf16.mxu0 0
    %2445 = vmatpush1.bf16.msra.mxu0 %v2408
    %2446 = vmatprep.subr.bf16.mxu0 0
    %2447 = vmatpush1.bf16.msra.mxu0 %v2409
    %2448 = vmatprep.subr.bf16.mxu0 0
    %2449 = vmatpush1.bf16.msra.mxu0 %v2410
    %2450 = vmatprep.subr.bf16.mxu0 0
    %2451 = vmatpush1.bf16.msra.mxu0 %v2411
    %2452 = vmatprep.subr.bf16.mxu0 0
    %2453 = vmatpush1.bf16.msra.mxu0 %v2412
    %2454 = vmatprep.subr.bf16.mxu0 0
    %2455 = vmatpush1.bf16.msra.mxu0 %v2413
    %2456 = vmatprep.subr.bf16.mxu0 0
    %2457 = vmatpush1.bf16.msra.mxu0 %v2414
    %2458 = vmatprep.subr.bf16.mxu0 0
    %2459 = vmatpush1.bf16.msra.mxu0 %v2415
    %2460 = vmatprep.subr.bf16.mxu0 0
    %2461 = vmatpush1.bf16.msra.mxu0 %v2416
    %2462 = vmatprep.subr.bf16.mxu0 0
    %2463 = vmatpush1.bf16.msra.mxu0 %v2417
    %2464 = vmatprep.subr.bf16.mxu0 0
    %2465 = vmatpush1.bf16.msra.mxu0 %v2418
    %2466 = vmatprep.subr.bf16.mxu0 0
    %2467 = vmatpush1.bf16.msra.mxu0 %v2419
    %2468 = vmatprep.mubr.bf16.mxu0 %v2125
    %2469 = vmatmul.mubr.bf16.gmra.mrb[0].mxu0 %v2124
    %v2470 = vpop.f32.mrb[0].mxu0
    %v2471 = vadd.f32 %v2338, %v2470
    %v2472 = vpop.f32.mrb[0].mxu0
    %v2473 = vpop.f32.mrb[0].mxu0
    %v2474 = vpop.f32.mrb[0].mxu0
    %2475 = vdwg.mxu0
    %v2476 = vpack.c.bf16 %v2122, %v2122
    %v2477 = vpack.c.bf16 %v2123, %v2123
    %v2478 = vld [vmem:[#allocation14] sm:$0xf]
    %v2479 = vld [vmem:[#allocation14 + $0x4] sm:$0xf]
    %v2480 = vld [vmem:[#allocation14 + $0x8] sm:$0xf]
    %v2481 = vld [vmem:[#allocation14 + $0xc] sm:$0xf]
    %v2482 = vld [vmem:[#allocation14 + $0x10] sm:$0xf]
    %v2483 = vld [vmem:[#allocation14 + $0x14] sm:$0xf]
    %v2484 = vld [vmem:[#allocation14 + $0x18] sm:$0xf]
    %v2485 = vld [vmem:[#allocation14 + $0x1c] sm:$0xf]
    %v2486 = vld [vmem:[#allocation14 + $0x20] sm:$0xf]
    %v2487 = vld [vmem:[#allocation14 + $0x24] sm:$0xf]
    %v2488 = vld [vmem:[#allocation14 + $0x28] sm:$0xf]
    %v2489 = vld [vmem:[#allocation14 + $0x2c] sm:$0xf]
    %v2490 = vld [vmem:[#allocation14 + $0x30] sm:$0xf]
    %v2491 = vld [vmem:[#allocation14 + $0x34] sm:$0xf]
    %v2492 = vld [vmem:[#allocation14 + $0x38] sm:$0xf]
    %v2493 = vld [vmem:[#allocation14 + $0x3c] sm:$0xf]
    %v2494 = vld [vmem:[#allocation14 + $0x40] sm:$0xf]
    %v2495 = vld [vmem:[#allocation14 + $0x44] sm:$0xf]
    %v2496 = vld [vmem:[#allocation14 + $0x48] sm:$0xf]
    %v2497 = vld [vmem:[#allocation14 + $0x4c] sm:$0xf]
    %v2498 = vld [vmem:[#allocation14 + $0x50] sm:$0xf]
    %v2499 = vld [vmem:[#allocation14 + $0x54] sm:$0xf]
    %v2500 = vld [vmem:[#allocation14 + $0x58] sm:$0xf]
    %v2501 = vld [vmem:[#allocation14 + $0x5c] sm:$0xf]
    %v2502 = vld [vmem:[#allocation14 + $0x60] sm:$0xf]
    %v2503 = vld [vmem:[#allocation14 + $0x64] sm:$0xf]
    %v2504 = vld [vmem:[#allocation14 + $0x68] sm:$0xf]
    %v2505 = vld [vmem:[#allocation14 + $0x6c] sm:$0xf]
    %v2506 = vld [vmem:[#allocation14 + $0x70] sm:$0xf]
    %v2507 = vld [vmem:[#allocation14 + $0x74] sm:$0xf]
    %v2508 = vld [vmem:[#allocation14 + $0x78] sm:$0xf]
    %v2509 = vld [vmem:[#allocation14 + $0x7c] sm:$0xf]
    %v2510 = vld [vmem:[%s14] sm:$0x1]
    %v2512 = vlaneseq
    %v2513 = vshrl.u32 %v2512, 7
    %v2514 = vsub.s32 0, %v2513
    %v2515 = vrot.slane %v2510, %v2514
    %v2549 = vunpack.c.l.b16 %v2478
    %v2550 = vunpack.c.l.b16 %v2479
    %v2551 = vunpack.c.l.b16 %v2480
    %v2552 = vunpack.c.l.b16 %v2481
    %v2553 = vunpack.c.l.b16 %v2482
    %v2554 = vunpack.c.l.b16 %v2483
    %v2555 = vunpack.c.l.b16 %v2484
    %v2556 = vunpack.c.l.b16 %v2485
    %v2557 = vunpack.c.l.b16 %v2486
    %v2558 = vunpack.c.l.b16 %v2487
    %v2559 = vunpack.c.l.b16 %v2488
    %v2560 = vunpack.c.l.b16 %v2489
    %v2561 = vunpack.c.l.b16 %v2490
    %v2562 = vunpack.c.l.b16 %v2491
    %v2563 = vunpack.c.l.b16 %v2492
    %v2564 = vunpack.c.l.b16 %v2493
    %v2565 = vunpack.c.l.b16 %v2494
    %v2566 = vunpack.c.l.b16 %v2495
    %v2567 = vunpack.c.l.b16 %v2496
    %v2568 = vunpack.c.l.b16 %v2497
    %v2569 = vunpack.c.l.b16 %v2498
    %v2570 = vunpack.c.l.b16 %v2499
    %v2571 = vunpack.c.l.b16 %v2500
    %v2572 = vunpack.c.l.b16 %v2501
    %v2573 = vunpack.c.l.b16 %v2502
    %v2574 = vunpack.c.l.b16 %v2503
    %v2575 = vunpack.c.l.b16 %v2504
    %v2576 = vunpack.c.l.b16 %v2505
    %v2577 = vunpack.c.l.b16 %v2506
    %v2578 = vunpack.c.l.b16 %v2507
    %v2579 = vunpack.c.l.b16 %v2508
    %v2580 = vunpack.c.l.b16 %v2509
    %v2581 = vpack.c.b16 %v2550, %v2549
    %v2582 = vpack.c.b16 %v2552, %v2551
    %v2583 = vpack.c.b16 %v2554, %v2553
    %v2584 = vpack.c.b16 %v2556, %v2555
    %v2585 = vpack.c.b16 %v2558, %v2557
    %v2586 = vpack.c.b16 %v2560, %v2559
    %v2587 = vpack.c.b16 %v2562, %v2561
    %v2588 = vpack.c.b16 %v2564, %v2563
    %v2589 = vpack.c.b16 %v2566, %v2565
    %v2590 = vpack.c.b16 %v2568, %v2567
    %v2591 = vpack.c.b16 %v2570, %v2569
    %v2592 = vpack.c.b16 %v2572, %v2571
    %v2593 = vpack.c.b16 %v2574, %v2573
    %v2594 = vpack.c.b16 %v2576, %v2575
    %v2595 = vpack.c.b16 %v2578, %v2577
    %v2596 = vpack.c.b16 %v2580, %v2579
    %2613 = vmatprep.subr.bf16.mxu0 0
    %2614 = vmatpush1.bf16.msra.mxu0 %v2581
    %2615 = vmatprep.subr.bf16.mxu0 0
    %2616 = vmatpush1.bf16.msra.mxu0 %v2582
    %2617 = vmatprep.subr.bf16.mxu0 0
    %2618 = vmatpush1.bf16.msra.mxu0 %v2583
    %2619 = vmatprep.subr.bf16.mxu0 0
    %2620 = vmatpush1.bf16.msra.mxu0 %v2584
    %2621 = vmatprep.subr.bf16.mxu0 0
    %2622 = vmatpush1.bf16.msra.mxu0 %v2585
    %2623 = vmatprep.subr.bf16.mxu0 0
    %2624 = vmatpush1.bf16.msra.mxu0 %v2586
    %2625 = vmatprep.subr.bf16.mxu0 0
    %2626 = vmatpush1.bf16.msra.mxu0 %v2587
    %2627 = vmatprep.subr.bf16.mxu0 0
    %2628 = vmatpush1.bf16.msra.mxu0 %v2588
    %2629 = vmatprep.subr.bf16.mxu0 0
    %2630 = vmatpush1.bf16.msra.mxu0 %v2589
    %2631 = vmatprep.subr.bf16.mxu0 0
    %2632 = vmatpush1.bf16.msra.mxu0 %v2590
    %2633 = vmatprep.subr.bf16.mxu0 0
    %2634 = vmatpush1.bf16.msra.mxu0 %v2591
    %2635 = vmatprep.subr.bf16.mxu0 0
    %2636 = vmatpush1.bf16.msra.mxu0 %v2592
    %2637 = vmatprep.subr.bf16.mxu0 0
    %2638 = vmatpush1.bf16.msra.mxu0 %v2593
    %2639 = vmatprep.subr.bf16.mxu0 0
    %2640 = vmatpush1.bf16.msra.mxu0 %v2594
    %2641 = vmatprep.subr.bf16.mxu0 0
    %2642 = vmatpush1.bf16.msra.mxu0 %v2595
    %2643 = vmatprep.subr.bf16.mxu0 0
    %2644 = vmatpush1.bf16.msra.mxu0 %v2596
    %2645 = vmatprep.mubr.bf16.mxu0 %v2477
    %2646 = vmatmul.mubr.bf16.gmra.mrb[0].mxu0 %v2476
    %v2647 = vpop.f32.mrb[0].mxu0
    %v2648 = vadd.f32 %v2515, %v2647
    %v2649 = vpop.f32.mrb[0].mxu0
    %v2650 = vpop.f32.mrb[0].mxu0
    %v2651 = vpop.f32.mrb[0].mxu0
    %2652 = vdwg.mxu0
    %v2653 = vlaneseq
    %v2654 = vand.u32 %v2653, 127
    %vm2655 = vcmp.lt.s32.totalorder %v2654, 30
    %v2656 = vmin.f32 %v2296, %v2471
    %v2657 = vmax.f32 %v2296, %v2471
    %v2658 = vsel %vm2655, %v2656, %v2657
    %v2659 = vsub.f32 0.0, %v2648
    %v2660 = vmul.f32 %v2659, 1.442695
    %v2661 = vpow.pop %v2660
    %v2662 = vadd.f32 %v2661, 1.0
    %v2663 = vrcp.pop %v2662
    %vm2664 = vcmp.lt.s32.totalorder %v2654, 60
    %vm2665 = vcmp.lt.s32.totalorder %v2654, 70
    %v2666 = vsel %vm2665, %v2663, 0.0
    %v2667 = vsel %vm2664, %v2658, %v2666
    %2668 = vst [vmem:[#allocation16] sm:$0x3] %v2667
    // Predicated region
    $region94: #{tpu_custom_call.1} parent=1 // pred_check
      _
    $region95: #{tpu_custom_call.1} parent=1 // pred_check_branch
      %2670 = sbr.rel (0) target = $region97
    $region96: #{tpu_custom_call.1} parent=1 // pred_region
      %s2672 = ssub.s32 32, 32
      %2673 = vsyncadd [#allocation4], %s2672
      %s2675 = sshll.u32 [#allocation16], 4
      %s2676 = int_to_ptr.vmem [resolvable:$true] %s2675
      %2678 = dma.vmem_to_hbm [thread:$0]  %s2676, 32, %s15, [#allocation4]
    $region97: #{tpu_custom_call.1} parent=1 // pred_fallthru
      _
    // Predicated region
    $region98: #{tpu_custom_call.1} parent=1 // pred_check
      _
    $region99: #{tpu_custom_call.1} parent=1 // pred_check_branch
      %2680 = sbr.rel (0) target = $region101
    $region100: #{tpu_custom_call.1} parent=1 // pred_region
      %2681 = dma.done [#allocation4], 32
    $region101: #{tpu_custom_call.1} parent=1 // pred_fallthru
      _
    %2682 = vsyncpa [#allocation3], 1
    %2683 = vsyncpa [#allocation6], 1
    %2684 = vsyncpa [#allocation9], 1
    %2685 = vsyncpa [#allocation12], 1
    %2686 = vsyncpa [#allocation15], 1
    %2687 = vsyncpa [#allocation4], 1

</llo_original>
